<compile_context>
chip_gen: v7x
topology: tpu7x:2x2x1
jax: 0.10.0
libtpu: 0.0.40
codegen_flags: <defaults>
</compile_context>

<pallas_src>
import math
import functools

import jax
import jax.numpy as jnp
from jax.experimental import pallas as pl
from jax.experimental.pallas import tpu as pltpu


def _gelu_tanh(x):
    # 0.5 * x * (1 + tanh(sqrt(2/pi) * (x + 0.044715 * x^3)))  — matches GELUActivation
    c = math.sqrt(2.0 / math.pi)
    return 0.5 * x * (1.0 + jnp.tanh(c * (x + 0.044715 * x * x * x)))


def encoder_layer_kernel(x_ref, ln_g_ref, ln_b_ref,
                         wqkv_ref, bqkv_ref, wo_ref, bo_ref,
                         w1_ref, b1_ref, w2_ref, b2_ref,
                         out_ref, *, num_heads, ln_eps):
    """One full EncoderLayer for one batch tile.

    x_ref:    (Bt, S, E) f32
    wqkv_ref: (3, E, E)  bf16  pre-transposed: q/k/v = n1 @ wqkv[i]
    bqkv_ref: (3, 1, E)  f32
    wo_ref:   (E, E)     bf16  pre-transposed
    w1_ref:   (E, Ehid)  bf16  pre-transposed
    w2_ref:   (Ehid, E)  bf16  pre-transposed
    """
    Bt, S, E = x_ref.shape
    M = Bt * S
    hd = E // num_heads

    x = x_ref[...].astype(jnp.float32).reshape(M, E)         # (M, E) f32 rows
    g = ln_g_ref[...]                                        # (1, E)
    b = ln_b_ref[...]                                        # (1, E)

    def layernorm(v):                                        # f32 statistics
        mu = jnp.mean(v, axis=-1, keepdims=True)
        var = jnp.mean((v - mu) ** 2, axis=-1, keepdims=True)
        return (v - mu) * jax.lax.rsqrt(var + ln_eps) * g + b

    # ---------------- self-attention block ----------------
    n1 = layernorm(x).astype(jnp.bfloat16)                   # bf16 matmul LHS

    q = jnp.dot(n1, wqkv_ref[0], preferred_element_type=jnp.float32) + bqkv_ref[0]
    k = jnp.dot(n1, wqkv_ref[1], preferred_element_type=jnp.float32) + bqkv_ref[1]
    v = jnp.dot(n1, wqkv_ref[2], preferred_element_type=jnp.float32) + bqkv_ref[2]

    scale = 1.0 / math.sqrt(hd)
    q = (q * scale).astype(jnp.bfloat16).reshape(Bt, S, E)
    k = k.astype(jnp.bfloat16).reshape(Bt, S, E)
    v = v.astype(jnp.bfloat16).reshape(Bt, S, E)

    # Static loop over heads (num_heads is small here).
    # TODO(synk): for >=12 heads switch to lax.fori_loop / a heads grid axis
    #             to bound vreg live ranges.
    ctx_heads = []
    for h in range(num_heads):
        sl = slice(h * hd, (h + 1) * hd)
        qh, kh, vh = q[..., sl], k[..., sl], v[..., sl]       # (Bt, S, hd)
        s = jnp.einsum("bqd,bkd->bqk", qh, kh,
                       preferred_element_type=jnp.float32)    # (Bt, S, S) f32
        s = s - jnp.max(s, axis=-1, keepdims=True)
        p = jnp.exp(s)
        denom = jnp.sum(p, axis=-1, keepdims=True)
        p = (p * pl.reciprocal(denom, approx=True)).astype(jnp.bfloat16)
        ctx_heads.append(jnp.einsum("bqk,bkd->bqd", p, vh,
                                    preferred_element_type=jnp.float32))
    ctx = jnp.concatenate(ctx_heads, axis=-1)                 # (Bt, S, E) f32
    ctx = ctx.reshape(M, E).astype(jnp.bfloat16)

    # single (M, E) @ (E, E) output projection (replaces per-head K=hd matmuls)
    attn_out = jnp.dot(ctx, wo_ref[...],
                       preferred_element_type=jnp.float32) + bo_ref[...]

    x = x + attn_out                                          # residual (dropout = identity)

    # ---------------- feed-forward block ----------------
    n2 = layernorm(x).astype(jnp.bfloat16)                    # same pre_norm params (matches module)
    h1 = jnp.dot(n2, w1_ref[...], preferred_element_type=jnp.float32) + b1_ref[...]
    h1 = _gelu_tanh(h1).astype(jnp.bfloat16)                  # GELU in f32, cast only for matmul
    ff = jnp.dot(h1, w2_ref[...], preferred_element_type=jnp.float32) + b2_ref[...]

    x = x + ff                                                # residual (dropout = identity)
    out_ref[...] = x.reshape(Bt, S, E).astype(out_ref.dtype)


def _choose_batch_tile(B, S):
    # smallest divisor of B that gives >=128 flattened rows per grid step;
    # otherwise process the whole batch in one step (small/toy configs).
    for bt in range(1, B + 1):
        if B % bt == 0 and bt * S >= 128:
            return bt
    return B


def _vmem_limit_bytes(block_b, S, E, Ehid):
    weights = 2 * (4 * E * E + 2 * E * Ehid)                  # bf16 weights
    acts = 4 * block_b * S * (8 * E + 2 * Ehid + 2 * S)       # rough f32 working set
    est = 2 * weights + 4 * acts + (1 << 20)
    # keep inside v7x's 64 MiB physical VMEM; never below the 32 MiB default.
    return int(min(max(est, 32 * 1024 * 1024), 64 * 1024 * 1024))


def encoder_layer(x, kp, *, num_heads, ln_eps=1e-5, block_b=None):
    B, S, E = x.shape
    Ehid = kp["w1_t"].shape[1]
    if block_b is None:
        block_b = _choose_batch_tile(B, S)
    grid = (B // block_b,)

    def const_spec(arr):                                      # weight resident across the grid
        nd = arr.ndim
        return pl.BlockSpec(arr.shape, lambda i, _nd=nd: (0,) * _nd)

    kernel = functools.partial(encoder_layer_kernel,
                               num_heads=num_heads, ln_eps=ln_eps)
    return pl.pallas_call(
        kernel,
        out_shape=jax.ShapeDtypeStruct((B, S, E), x.dtype),
        grid=grid,
        in_specs=[
            pl.BlockSpec((block_b, S, E), lambda i: (i, 0, 0)),   # x
            const_spec(kp["ln_g"]), const_spec(kp["ln_b"]),       # layernorm gamma, beta
            const_spec(kp["wqkv_t"]), const_spec(kp["bqkv"]),     # in_proj (pre-transposed, bf16)
            const_spec(kp["wo_t"]), const_spec(kp["bo"]),         # out_proj
            const_spec(kp["w1_t"]), const_spec(kp["b1"]),         # fc1
            const_spec(kp["w2_t"]), const_spec(kp["b2"]),         # fc2
        ],
        out_specs=pl.BlockSpec((block_b, S, E), lambda i: (i, 0, 0)),
        compiler_params=pltpu.CompilerParams(
            dimension_semantics=("parallel",),
            vmem_limit_bytes=_vmem_limit_bytes(block_b, S, E, Ehid)),
    )(x, kp["ln_g"], kp["ln_b"], kp["wqkv_t"], kp["bqkv"],
      kp["wo_t"], kp["bo"], kp["w1_t"], kp["b1"], kp["w2_t"], kp["b2"])


def transformer_encoder(x, layer_params, *, num_heads):
    for kp in layer_params:
        x = encoder_layer(x, kp, num_heads=num_heads)
    return x


# ---------------- parameter init / packing ----------------
def init_layer_params(key, E, expansion):
    """PyTorch-convention params: Linear weight (out,in), bias (out,)."""
    ks = jax.random.split(key, 4)

    def linear(k, out_dim, in_dim):
        bound = 1.0 / math.sqrt(in_dim)
        kw, kb = jax.random.split(k)
        w = jax.random.uniform(kw, (out_dim, in_dim), jnp.float32, -bound, bound)
        bb = jax.random.uniform(kb, (out_dim,), jnp.float32, -bound, bound)
        return w, bb

    wqkv, bqkv = linear(ks[0], 3 * E, E)
    wo, bo = linear(ks[1], E, E)
    w1, b1 = linear(ks[2], E * expansion, E)
    w2, b2 = linear(ks[3], E, E * expansion)
    return dict(ln_g=jnp.ones((E,), jnp.float32), ln_b=jnp.zeros((E,), jnp.float32),
                wqkv=wqkv, bqkv=bqkv, wo=wo, bo=bo, w1=w1, b1=b1, w2=w2, b2=b2)


def prepare_kernel_params(p):
    """Pre-transpose + cast weights to bf16 (kernel layout)."""
    E = p["wo"].shape[0]
    Ehid = p["w1"].shape[0]
    wq, wk, wv = p["wqkv"][:E], p["wqkv"][E:2 * E], p["wqkv"][2 * E:]
    return dict(
        ln_g=p["ln_g"].reshape(1, E).astype(jnp.float32),
        ln_b=p["ln_b"].reshape(1, E).astype(jnp.float32),
        wqkv_t=jnp.stack([wq.T, wk.T, wv.T]).astype(jnp.bfloat16),   # (3, E, E)
        bqkv=p["bqkv"].reshape(3, 1, E).astype(jnp.float32),
        wo_t=p["wo"].T.astype(jnp.bfloat16),                          # (E, E)
        bo=p["bo"].reshape(1, E).astype(jnp.float32),
        w1_t=p["w1"].T.astype(jnp.bfloat16),                          # (E, Ehid)
        b1=p["b1"].reshape(1, Ehid).astype(jnp.float32),
        w2_t=p["w2"].T.astype(jnp.bfloat16),                          # (Ehid, E)
        b2=p["b2"].reshape(1, E).astype(jnp.float32),
    )


# ---------------- pure-JAX references ----------------
def _ref_layer_bf16(x, kp, num_heads, ln_eps=1e-5):
    """Mirror of the kernel math (bf16 matmul operands, f32 accumulation)."""
    B, S, E = x.shape
    hd = E // num_heads
    g, b = kp["ln_g"], kp["ln_b"]

    def ln(v):
        mu = jnp.mean(v, axis=-1, keepdims=True)
        var = jnp.mean((v - mu) ** 2, axis=-1, keepdims=True)
        return (v - mu) * jax.lax.rsqrt(var + ln_eps) * g + b

    def mm(a, w):
        return jnp.dot(a.astype(jnp.bfloat16), w, preferred_element_type=jnp.float32)

    n1 = ln(x)
    q = mm(n1, kp["wqkv_t"][0]) + kp["bqkv"][0]
    k = mm(n1, kp["wqkv_t"][1]) + kp["bqkv"][1]
    v = mm(n1, kp["wqkv_t"][2]) + kp["bqkv"][2]
    scale = 1.0 / math.sqrt(hd)
    qb = (q * scale).astype(jnp.bfloat16)
    kb = k.astype(jnp.bfloat16)
    vb = v.astype(jnp.bfloat16)
    ctx_heads = []
    for h in range(num_heads):
        sl = slice(h * hd, (h + 1) * hd)
        s = jnp.einsum("bqd,bkd->bqk", qb[..., sl], kb[..., sl],
                       preferred_element_type=jnp.float32)
        s = s - jnp.max(s, axis=-1, keepdims=True)
        pr = jnp.exp(s)
        pr = (pr / jnp.sum(pr, axis=-1, keepdims=True)).astype(jnp.bfloat16)
        ctx_heads.append(jnp.einsum("bqk,bkd->bqd", pr, vb[..., sl],
                                    preferred_element_type=jnp.float32))
    ctx = jnp.concatenate(ctx_heads, axis=-1)
    x = x + (mm(ctx, kp["wo_t"]) + kp["bo"])
    n2 = ln(x)
    h1 = _gelu_tanh(mm(n2, kp["w1_t"]) + kp["b1"])
    return x + (mm(h1, kp["w2_t"]) + kp["b2"])


def _ref_layer_f32(x, p, num_heads, ln_eps=1e-5):
    """Full-f32 reference with PyTorch module semantics."""
    B, S, E = x.shape
    hd = E // num_heads

    def ln(v):
        mu = jnp.mean(v, axis=-1, keepdims=True)
        var = jnp.mean((v - mu) ** 2, axis=-1, keepdims=True)
        return (v - mu) * jax.lax.rsqrt(var + ln_eps) * p["ln_g"] + p["ln_b"]

    n1 = ln(x)
    qkv = n1 @ p["wqkv"].T + p["bqkv"]
    q, k, v = qkv[..., :E], qkv[..., E:2 * E], qkv[..., 2 * E:]
    qh = q.reshape(B, S, num_heads, hd).transpose(0, 2, 1, 3) / math.sqrt(hd)
    kh = k.reshape(B, S, num_heads, hd).transpose(0, 2, 1, 3)
    vh = v.reshape(B, S, num_heads, hd).transpose(0, 2, 1, 3)
    att = jax.nn.softmax(jnp.einsum("bhqd,bhkd->bhqk", qh, kh), axis=-1)
    ctx = jnp.einsum("bhqk,bhkd->bhqd", att, vh).transpose(0, 2, 1, 3).reshape(B, S, E)
    x = x + (ctx @ p["wo"].T + p["bo"])
    n2 = ln(x)
    h1 = _gelu_tanh(n2 @ p["w1"].T + p["b1"])
    return x + (h1 @ p["w2"].T + p["b2"])


if __name__ == "__main__":
    # Small config: embed_dim=32, num_heads=4, expansion=4, dropout=0.0, num_encoders=2
    B, S, E = 2, 8, 32
    NUM_HEADS, EXPANSION, NUM_ENCODERS = 4, 4, 2

    root = jax.random.PRNGKey(0)
    kx, *layer_keys = jax.random.split(root, 1 + NUM_ENCODERS)
    x = jax.random.normal(kx, (B, S, E), jnp.float32)

    torch_params = [init_layer_params(k, E, EXPANSION) for k in layer_keys]
    kernel_params = [prepare_kernel_params(p) for p in torch_params]

    out = transformer_encoder(x, kernel_params, num_heads=NUM_HEADS)
    out = jax.block_until_ready(out)

    # correctness: tight check vs bf16-matched JAX math, coarse check vs f32 PyTorch math
    ref_bf16 = x
    for kp in kernel_params:
        ref_bf16 = _ref_layer_bf16(ref_bf16, kp, NUM_HEADS)
    ref_f32 = x
    for p in torch_params:
        ref_f32 = _ref_layer_f32(ref_f32, p, NUM_HEADS)

    assert out.shape == (B, S, E)
    assert bool(jnp.all(jnp.isfinite(out)))
    err_bf16 = float(jnp.max(jnp.abs(out - ref_bf16)))
    err_f32 = float(jnp.max(jnp.abs(out - ref_f32)))
    assert err_bf16 < 2e-2, err_bf16
    assert err_f32 < 2e-1, err_f32

    print("KERNEL_OK")
</pallas_src>

<mosaic_0001>
module attributes {stable_mosaic.version = 11 : i64} {
  func.func @encoder_layer_kernel(%arg0: i32, %arg1: memref<2x8x32xf32, #tpu.memory_space<vmem>>, %arg2: memref<1x32xf32, #tpu.memory_space<vmem>>, %arg3: memref<1x32xf32, #tpu.memory_space<vmem>>, %arg4: memref<3x32x32xbf16, #tpu.memory_space<vmem>>, %arg5: memref<3x1x32xf32, #tpu.memory_space<vmem>>, %arg6: memref<32x32xbf16, #tpu.memory_space<vmem>>, %arg7: memref<1x32xf32, #tpu.memory_space<vmem>>, %arg8: memref<32x128xbf16, #tpu.memory_space<vmem>>, %arg9: memref<1x128xf32, #tpu.memory_space<vmem>>, %arg10: memref<128x32xbf16, #tpu.memory_space<vmem>>, %arg11: memref<1x32xf32, #tpu.memory_space<vmem>>, %arg12: memref<2x8x32xf32, #tpu.memory_space<vmem>>) attributes {dimension_semantics = [#tpu.dimension_semantics<parallel>], iteration_bounds = array<i64: 1>, scalar_prefetch = 0 : i64, scratch_operands = 0 : i64, tpu.core_type = #tpu.core_type<tc>, window_params = [{transform_indices = @transform_0, window_bounds = array<i64: 2, 8, 32>}, {pipeline_mode = #tpu.pipeline_mode<synchronous>, transform_indices = @transform_1, window_bounds = array<i64: 1, 32>}, {pipeline_mode = #tpu.pipeline_mode<synchronous>, transform_indices = @transform_2, window_bounds = array<i64: 1, 32>}, {pipeline_mode = #tpu.pipeline_mode<synchronous>, transform_indices = @transform_3, window_bounds = array<i64: 3, 32, 32>}, {pipeline_mode = #tpu.pipeline_mode<synchronous>, transform_indices = @transform_4, window_bounds = array<i64: 3, 1, 32>}, {pipeline_mode = #tpu.pipeline_mode<synchronous>, transform_indices = @transform_5, window_bounds = array<i64: 32, 32>}, {pipeline_mode = #tpu.pipeline_mode<synchronous>, transform_indices = @transform_6, window_bounds = array<i64: 1, 32>}, {pipeline_mode = #tpu.pipeline_mode<synchronous>, transform_indices = @transform_7, window_bounds = array<i64: 32, 128>}, {pipeline_mode = #tpu.pipeline_mode<synchronous>, transform_indices = @transform_8, window_bounds = array<i64: 1, 128>}, {pipeline_mode = #tpu.pipeline_mode<synchronous>, transform_indices = @transform_9, window_bounds = array<i64: 128, 32>}, {pipeline_mode = #tpu.pipeline_mode<synchronous>, transform_indices = @transform_10, window_bounds = array<i64: 1, 32>}, {transform_indices = @transform_11, window_bounds = array<i64: 2, 8, 32>}]} {
    %c0 = arith.constant 0 : index
    %c0_0 = arith.constant 0 : index
    %c0_1 = arith.constant 0 : index
    %0 = vector.load %arg1[%c0, %c0_0, %c0_1] : memref<2x8x32xf32, #tpu.memory_space<vmem>>, vector<2x8x32xf32>
    %1 = vector.shape_cast %0 : vector<2x8x32xf32> to vector<16x32xf32>
    %c0_2 = arith.constant 0 : index
    %c0_3 = arith.constant 0 : index
    %2 = vector.load %arg2[%c0_2, %c0_3] : memref<1x32xf32, #tpu.memory_space<vmem>>, vector<1x32xf32>
    %c0_4 = arith.constant 0 : index
    %c0_5 = arith.constant 0 : index
    %3 = vector.load %arg3[%c0_4, %c0_5] : memref<1x32xf32, #tpu.memory_space<vmem>>, vector<1x32xf32>
    %cst = arith.constant dense<0.000000e+00> : vector<16xf32>
    %4 = vector.multi_reduction <add>, %1, %cst [1] : vector<16x32xf32> to vector<16xf32>
    %5 = vector.shape_cast %4 : vector<16xf32> to vector<16x1xf32>
    %cst_6 = arith.constant 3.200000e+01 : f32
    %6 = vector.broadcast %cst_6 : f32 to vector<16x1xf32>
    %7 = arith.divf %5, %6 : vector<16x1xf32>
    %8 = vector.broadcast %7 : vector<16x1xf32> to vector<16x32xf32>
    %9 = arith.subf %1, %8 : vector<16x32xf32>
    %10 = arith.mulf %9, %9 : vector<16x32xf32>
    %cst_7 = arith.constant dense<0.000000e+00> : vector<16xf32>
    %11 = vector.multi_reduction <add>, %10, %cst_7 [1] : vector<16x32xf32> to vector<16xf32>
    %12 = vector.shape_cast %11 : vector<16xf32> to vector<16x1xf32>
    %cst_8 = arith.constant 3.200000e+01 : f32
    %13 = vector.broadcast %cst_8 : f32 to vector<16x1xf32>
    %14 = arith.divf %12, %13 : vector<16x1xf32>
    %15 = vector.broadcast %7 : vector<16x1xf32> to vector<16x32xf32>
    %16 = arith.subf %1, %15 : vector<16x32xf32>
    %cst_9 = arith.constant 9.99999974E-6 : f32
    %17 = vector.broadcast %cst_9 : f32 to vector<16x1xf32>
    %18 = arith.addf %14, %17 : vector<16x1xf32>
    %19 = math.rsqrt %18 : vector<16x1xf32>
    %20 = vector.broadcast %19 : vector<16x1xf32> to vector<16x32xf32>
    %21 = arith.mulf %16, %20 : vector<16x32xf32>
    %22 = vector.broadcast %2 : vector<1x32xf32> to vector<16x32xf32>
    %23 = arith.mulf %21, %22 : vector<16x32xf32>
    %24 = vector.broadcast %3 : vector<1x32xf32> to vector<16x32xf32>
    %25 = arith.addf %23, %24 : vector<16x32xf32>
    %26 = arith.truncf %25 : vector<16x32xf32> to vector<16x32xbf16>
    %c0_10 = arith.constant 0 : index
    %c0_11 = arith.constant 0 : index
    %c0_12 = arith.constant 0 : index
    %27 = vector.load %arg4[%c0_10, %c0_11, %c0_12] : memref<3x32x32xbf16, #tpu.memory_space<vmem>>, vector<1x32x32xbf16>
    %28 = vector.shape_cast %27 : vector<1x32x32xbf16> to vector<32x32xbf16>
    %cst_13 = arith.constant dense<0.000000e+00> : vector<16x32xf32>
    %29 = tpu.matmul %26, %28, %cst_13 {dimension_numbers = #tpu.dot_dimension_numbers<[1], [0], [0], [1], [0, 0, 1, 1], [], []>} : vector<16x32xbf16>, vector<32x32xbf16>, vector<16x32xf32> -> vector<16x32xf32>
    %c0_14 = arith.constant 0 : index
    %c0_15 = arith.constant 0 : index
    %c0_16 = arith.constant 0 : index
    %30 = vector.load %arg5[%c0_14, %c0_15, %c0_16] : memref<3x1x32xf32, #tpu.memory_space<vmem>>, vector<1x1x32xf32>
    %31 = vector.shape_cast %30 : vector<1x1x32xf32> to vector<1x32xf32>
    %32 = vector.broadcast %31 : vector<1x32xf32> to vector<16x32xf32>
    %33 = arith.addf %29, %32 : vector<16x32xf32>
    %c1 = arith.constant 1 : index
    %c0_17 = arith.constant 0 : index
    %c0_18 = arith.constant 0 : index
    %34 = vector.load %arg4[%c1, %c0_17, %c0_18] : memref<3x32x32xbf16, #tpu.memory_space<vmem>>, vector<1x32x32xbf16>
    %35 = vector.shape_cast %34 : vector<1x32x32xbf16> to vector<32x32xbf16>
    %cst_19 = arith.constant dense<0.000000e+00> : vector<16x32xf32>
    %36 = tpu.matmul %26, %35, %cst_19 {dimension_numbers = #tpu.dot_dimension_numbers<[1], [0], [0], [1], [0, 0, 1, 1], [], []>} : vector<16x32xbf16>, vector<32x32xbf16>, vector<16x32xf32> -> vector<16x32xf32>
    %c1_20 = arith.constant 1 : index
    %c0_21 = arith.constant 0 : index
    %c0_22 = arith.constant 0 : index
    %37 = vector.load %arg5[%c1_20, %c0_21, %c0_22] : memref<3x1x32xf32, #tpu.memory_space<vmem>>, vector<1x1x32xf32>
    %38 = vector.shape_cast %37 : vector<1x1x32xf32> to vector<1x32xf32>
    %39 = vector.broadcast %38 : vector<1x32xf32> to vector<16x32xf32>
    %40 = arith.addf %36, %39 : vector<16x32xf32>
    %c2 = arith.constant 2 : index
    %c0_23 = arith.constant 0 : index
    %c0_24 = arith.constant 0 : index
    %41 = vector.load %arg4[%c2, %c0_23, %c0_24] : memref<3x32x32xbf16, #tpu.memory_space<vmem>>, vector<1x32x32xbf16>
    %42 = vector.shape_cast %41 : vector<1x32x32xbf16> to vector<32x32xbf16>
    %cst_25 = arith.constant dense<0.000000e+00> : vector<16x32xf32>
    %43 = tpu.matmul %26, %42, %cst_25 {dimension_numbers = #tpu.dot_dimension_numbers<[1], [0], [0], [1], [0, 0, 1, 1], [], []>} : vector<16x32xbf16>, vector<32x32xbf16>, vector<16x32xf32> -> vector<16x32xf32>
    %c2_26 = arith.constant 2 : index
    %c0_27 = arith.constant 0 : index
    %c0_28 = arith.constant 0 : index
    %44 = vector.load %arg5[%c2_26, %c0_27, %c0_28] : memref<3x1x32xf32, #tpu.memory_space<vmem>>, vector<1x1x32xf32>
    %45 = vector.shape_cast %44 : vector<1x1x32xf32> to vector<1x32xf32>
    %46 = vector.broadcast %45 : vector<1x32xf32> to vector<16x32xf32>
    %47 = arith.addf %43, %46 : vector<16x32xf32>
    %cst_29 = arith.constant 0.353553385 : f32
    %48 = vector.broadcast %cst_29 : f32 to vector<16x32xf32>
    %49 = arith.mulf %33, %48 : vector<16x32xf32>
    %50 = arith.truncf %49 : vector<16x32xf32> to vector<16x32xbf16>
    %51 = vector.shape_cast %50 : vector<16x32xbf16> to vector<2x8x32xbf16>
    %52 = arith.truncf %40 : vector<16x32xf32> to vector<16x32xbf16>
    %53 = vector.shape_cast %52 : vector<16x32xbf16> to vector<2x8x32xbf16>
    %54 = arith.truncf %47 : vector<16x32xf32> to vector<16x32xbf16>
    %55 = vector.shape_cast %54 : vector<16x32xbf16> to vector<2x8x32xbf16>
    %56 = vector.extract_strided_slice %51 {offsets = [0, 0, 0], sizes = [2, 8, 8], strides = [1, 1, 1]} : vector<2x8x32xbf16> to vector<2x8x8xbf16>
    %57 = vector.extract_strided_slice %53 {offsets = [0, 0, 0], sizes = [2, 8, 8], strides = [1, 1, 1]} : vector<2x8x32xbf16> to vector<2x8x8xbf16>
    %58 = vector.extract_strided_slice %55 {offsets = [0, 0, 0], sizes = [2, 8, 8], strides = [1, 1, 1]} : vector<2x8x32xbf16> to vector<2x8x8xbf16>
    "tpu.trace_start"() <{level = 10 : i32, message = "bqd,bkd->bqk"}> : () -> ()
    %cst_30 = arith.constant dense<0.000000e+00> : vector<2x8x8xf32>
    %59 = tpu.matmul %56, %57, %cst_30 {dimension_numbers = #tpu.dot_dimension_numbers<[2], [2], [1], [1], [0, 0, 0, 1, 1, 1], [0], [0]>} : vector<2x8x8xbf16>, vector<2x8x8xbf16>, vector<2x8x8xf32> -> vector<2x8x8xf32>
    "tpu.trace_stop"() : () -> ()
    %cst_31 = arith.constant dense<0xFF800000> : vector<2x8xf32>
    %60 = vector.multi_reduction <maximumf>, %59, %cst_31 [2] : vector<2x8x8xf32> to vector<2x8xf32>
    %61 = vector.shape_cast %60 : vector<2x8xf32> to vector<2x8x1xf32>
    %62 = vector.broadcast %61 : vector<2x8x1xf32> to vector<2x8x8xf32>
    %63 = arith.subf %59, %62 : vector<2x8x8xf32>
    %64 = math.exp %63 : vector<2x8x8xf32>
    %cst_32 = arith.constant dense<0.000000e+00> : vector<2x8xf32>
    %65 = vector.multi_reduction <add>, %64, %cst_32 [2] : vector<2x8x8xf32> to vector<2x8xf32>
    %66 = vector.shape_cast %65 : vector<2x8xf32> to vector<2x8x1xf32>
    %67 = tpu.reciprocal %66 {approx = true} : vector<2x8x1xf32> -> vector<2x8x1xf32>
    %68 = vector.broadcast %67 : vector<2x8x1xf32> to vector<2x8x8xf32>
    %69 = arith.mulf %64, %68 : vector<2x8x8xf32>
    %70 = arith.truncf %69 : vector<2x8x8xf32> to vector<2x8x8xbf16>
    "tpu.trace_start"() <{level = 10 : i32, message = "bqk,bkd->bqd"}> : () -> ()
    %cst_33 = arith.constant dense<0.000000e+00> : vector<2x8x8xf32>
    %71 = tpu.matmul %70, %58, %cst_33 {dimension_numbers = #tpu.dot_dimension_numbers<[2], [1], [1], [2], [0, 0, 0, 1, 1, 2], [0], [0]>} : vector<2x8x8xbf16>, vector<2x8x8xbf16>, vector<2x8x8xf32> -> vector<2x8x8xf32>
    "tpu.trace_stop"() : () -> ()
    %72 = vector.extract_strided_slice %51 {offsets = [0, 0, 8], sizes = [2, 8, 8], strides = [1, 1, 1]} : vector<2x8x32xbf16> to vector<2x8x8xbf16>
    %73 = vector.extract_strided_slice %53 {offsets = [0, 0, 8], sizes = [2, 8, 8], strides = [1, 1, 1]} : vector<2x8x32xbf16> to vector<2x8x8xbf16>
    %74 = vector.extract_strided_slice %55 {offsets = [0, 0, 8], sizes = [2, 8, 8], strides = [1, 1, 1]} : vector<2x8x32xbf16> to vector<2x8x8xbf16>
    "tpu.trace_start"() <{level = 10 : i32, message = "bqd,bkd->bqk"}> : () -> ()
    %cst_34 = arith.constant dense<0.000000e+00> : vector<2x8x8xf32>
    %75 = tpu.matmul %72, %73, %cst_34 {dimension_numbers = #tpu.dot_dimension_numbers<[2], [2], [1], [1], [0, 0, 0, 1, 1, 1], [0], [0]>} : vector<2x8x8xbf16>, vector<2x8x8xbf16>, vector<2x8x8xf32> -> vector<2x8x8xf32>
    "tpu.trace_stop"() : () -> ()
    %cst_35 = arith.constant dense<0xFF800000> : vector<2x8xf32>
    %76 = vector.multi_reduction <maximumf>, %75, %cst_35 [2] : vector<2x8x8xf32> to vector<2x8xf32>
    %77 = vector.shape_cast %76 : vector<2x8xf32> to vector<2x8x1xf32>
    %78 = vector.broadcast %77 : vector<2x8x1xf32> to vector<2x8x8xf32>
    %79 = arith.subf %75, %78 : vector<2x8x8xf32>
    %80 = math.exp %79 : vector<2x8x8xf32>
    %cst_36 = arith.constant dense<0.000000e+00> : vector<2x8xf32>
    %81 = vector.multi_reduction <add>, %80, %cst_36 [2] : vector<2x8x8xf32> to vector<2x8xf32>
    %82 = vector.shape_cast %81 : vector<2x8xf32> to vector<2x8x1xf32>
    %83 = tpu.reciprocal %82 {approx = true} : vector<2x8x1xf32> -> vector<2x8x1xf32>
    %84 = vector.broadcast %83 : vector<2x8x1xf32> to vector<2x8x8xf32>
    %85 = arith.mulf %80, %84 : vector<2x8x8xf32>
    %86 = arith.truncf %85 : vector<2x8x8xf32> to vector<2x8x8xbf16>
    "tpu.trace_start"() <{level = 10 : i32, message = "bqk,bkd->bqd"}> : () -> ()
    %cst_37 = arith.constant dense<0.000000e+00> : vector<2x8x8xf32>
    %87 = tpu.matmul %86, %74, %cst_37 {dimension_numbers = #tpu.dot_dimension_numbers<[2], [1], [1], [2], [0, 0, 0, 1, 1, 2], [0], [0]>} : vector<2x8x8xbf16>, vector<2x8x8xbf16>, vector<2x8x8xf32> -> vector<2x8x8xf32>
    "tpu.trace_stop"() : () -> ()
    %88 = vector.extract_strided_slice %51 {offsets = [0, 0, 16], sizes = [2, 8, 8], strides = [1, 1, 1]} : vector<2x8x32xbf16> to vector<2x8x8xbf16>
    %89 = vector.extract_strided_slice %53 {offsets = [0, 0, 16], sizes = [2, 8, 8], strides = [1, 1, 1]} : vector<2x8x32xbf16> to vector<2x8x8xbf16>
    %90 = vector.extract_strided_slice %55 {offsets = [0, 0, 16], sizes = [2, 8, 8], strides = [1, 1, 1]} : vector<2x8x32xbf16> to vector<2x8x8xbf16>
    "tpu.trace_start"() <{level = 10 : i32, message = "bqd,bkd->bqk"}> : () -> ()
    %cst_38 = arith.constant dense<0.000000e+00> : vector<2x8x8xf32>
    %91 = tpu.matmul %88, %89, %cst_38 {dimension_numbers = #tpu.dot_dimension_numbers<[2], [2], [1], [1], [0, 0, 0, 1, 1, 1], [0], [0]>} : vector<2x8x8xbf16>, vector<2x8x8xbf16>, vector<2x8x8xf32> -> vector<2x8x8xf32>
    "tpu.trace_stop"() : () -> ()
    %cst_39 = arith.constant dense<0xFF800000> : vector<2x8xf32>
    %92 = vector.multi_reduction <maximumf>, %91, %cst_39 [2] : vector<2x8x8xf32> to vector<2x8xf32>
    %93 = vector.shape_cast %92 : vector<2x8xf32> to vector<2x8x1xf32>
    %94 = vector.broadcast %93 : vector<2x8x1xf32> to vector<2x8x8xf32>
    %95 = arith.subf %91, %94 : vector<2x8x8xf32>
    %96 = math.exp %95 : vector<2x8x8xf32>
    %cst_40 = arith.constant dense<0.000000e+00> : vector<2x8xf32>
    %97 = vector.multi_reduction <add>, %96, %cst_40 [2] : vector<2x8x8xf32> to vector<2x8xf32>
    %98 = vector.shape_cast %97 : vector<2x8xf32> to vector<2x8x1xf32>
    %99 = tpu.reciprocal %98 {approx = true} : vector<2x8x1xf32> -> vector<2x8x1xf32>
    %100 = vector.broadcast %99 : vector<2x8x1xf32> to vector<2x8x8xf32>
    %101 = arith.mulf %96, %100 : vector<2x8x8xf32>
    %102 = arith.truncf %101 : vector<2x8x8xf32> to vector<2x8x8xbf16>
    "tpu.trace_start"() <{level = 10 : i32, message = "bqk,bkd->bqd"}> : () -> ()
    %cst_41 = arith.constant dense<0.000000e+00> : vector<2x8x8xf32>
    %103 = tpu.matmul %102, %90, %cst_41 {dimension_numbers = #tpu.dot_dimension_numbers<[2], [1], [1], [2], [0, 0, 0, 1, 1, 2], [0], [0]>} : vector<2x8x8xbf16>, vector<2x8x8xbf16>, vector<2x8x8xf32> -> vector<2x8x8xf32>
    "tpu.trace_stop"() : () -> ()
    %104 = vector.extract_strided_slice %51 {offsets = [0, 0, 24], sizes = [2, 8, 8], strides = [1, 1, 1]} : vector<2x8x32xbf16> to vector<2x8x8xbf16>
    %105 = vector.extract_strided_slice %53 {offsets = [0, 0, 24], sizes = [2, 8, 8], strides = [1, 1, 1]} : vector<2x8x32xbf16> to vector<2x8x8xbf16>
    %106 = vector.extract_strided_slice %55 {offsets = [0, 0, 24], sizes = [2, 8, 8], strides = [1, 1, 1]} : vector<2x8x32xbf16> to vector<2x8x8xbf16>
    "tpu.trace_start"() <{level = 10 : i32, message = "bqd,bkd->bqk"}> : () -> ()
    %cst_42 = arith.constant dense<0.000000e+00> : vector<2x8x8xf32>
    %107 = tpu.matmul %104, %105, %cst_42 {dimension_numbers = #tpu.dot_dimension_numbers<[2], [2], [1], [1], [0, 0, 0, 1, 1, 1], [0], [0]>} : vector<2x8x8xbf16>, vector<2x8x8xbf16>, vector<2x8x8xf32> -> vector<2x8x8xf32>
    "tpu.trace_stop"() : () -> ()
    %cst_43 = arith.constant dense<0xFF800000> : vector<2x8xf32>
    %108 = vector.multi_reduction <maximumf>, %107, %cst_43 [2] : vector<2x8x8xf32> to vector<2x8xf32>
    %109 = vector.shape_cast %108 : vector<2x8xf32> to vector<2x8x1xf32>
    %110 = vector.broadcast %109 : vector<2x8x1xf32> to vector<2x8x8xf32>
    %111 = arith.subf %107, %110 : vector<2x8x8xf32>
    %112 = math.exp %111 : vector<2x8x8xf32>
    %cst_44 = arith.constant dense<0.000000e+00> : vector<2x8xf32>
    %113 = vector.multi_reduction <add>, %112, %cst_44 [2] : vector<2x8x8xf32> to vector<2x8xf32>
    %114 = vector.shape_cast %113 : vector<2x8xf32> to vector<2x8x1xf32>
    %115 = tpu.reciprocal %114 {approx = true} : vector<2x8x1xf32> -> vector<2x8x1xf32>
    %116 = vector.broadcast %115 : vector<2x8x1xf32> to vector<2x8x8xf32>
    %117 = arith.mulf %112, %116 : vector<2x8x8xf32>
    %118 = arith.truncf %117 : vector<2x8x8xf32> to vector<2x8x8xbf16>
    "tpu.trace_start"() <{level = 10 : i32, message = "bqk,bkd->bqd"}> : () -> ()
    %cst_45 = arith.constant dense<0.000000e+00> : vector<2x8x8xf32>
    %119 = tpu.matmul %118, %106, %cst_45 {dimension_numbers = #tpu.dot_dimension_numbers<[2], [1], [1], [2], [0, 0, 0, 1, 1, 2], [0], [0]>} : vector<2x8x8xbf16>, vector<2x8x8xbf16>, vector<2x8x8xf32> -> vector<2x8x8xf32>
    "tpu.trace_stop"() : () -> ()
    %120 = tpu.concatenate %71, %87, %103, %119 in 2 : vector<2x8x8xf32>, vector<2x8x8xf32>, vector<2x8x8xf32>, vector<2x8x8xf32> -> vector<2x8x32xf32>
    %121 = vector.shape_cast %120 : vector<2x8x32xf32> to vector<16x32xf32>
    %122 = arith.truncf %121 : vector<16x32xf32> to vector<16x32xbf16>
    %c0_46 = arith.constant 0 : index
    %c0_47 = arith.constant 0 : index
    %123 = vector.load %arg6[%c0_46, %c0_47] : memref<32x32xbf16, #tpu.memory_space<vmem>>, vector<32x32xbf16>
    %cst_48 = arith.constant dense<0.000000e+00> : vector<16x32xf32>
    %124 = tpu.matmul %122, %123, %cst_48 {dimension_numbers = #tpu.dot_dimension_numbers<[1], [0], [0], [1], [0, 0, 1, 1], [], []>} : vector<16x32xbf16>, vector<32x32xbf16>, vector<16x32xf32> -> vector<16x32xf32>
    %c0_49 = arith.constant 0 : index
    %c0_50 = arith.constant 0 : index
    %125 = vector.load %arg7[%c0_49, %c0_50] : memref<1x32xf32, #tpu.memory_space<vmem>>, vector<1x32xf32>
    %126 = vector.broadcast %125 : vector<1x32xf32> to vector<16x32xf32>
    %127 = arith.addf %124, %126 : vector<16x32xf32>
    %128 = arith.addf %1, %127 : vector<16x32xf32>
    %cst_51 = arith.constant dense<0.000000e+00> : vector<16xf32>
    %129 = vector.multi_reduction <add>, %128, %cst_51 [1] : vector<16x32xf32> to vector<16xf32>
    %130 = vector.shape_cast %129 : vector<16xf32> to vector<16x1xf32>
    %cst_52 = arith.constant 3.200000e+01 : f32
    %131 = vector.broadcast %cst_52 : f32 to vector<16x1xf32>
    %132 = arith.divf %130, %131 : vector<16x1xf32>
    %133 = vector.broadcast %132 : vector<16x1xf32> to vector<16x32xf32>
    %134 = arith.subf %128, %133 : vector<16x32xf32>
    %135 = arith.mulf %134, %134 : vector<16x32xf32>
    %cst_53 = arith.constant dense<0.000000e+00> : vector<16xf32>
    %136 = vector.multi_reduction <add>, %135, %cst_53 [1] : vector<16x32xf32> to vector<16xf32>
    %137 = vector.shape_cast %136 : vector<16xf32> to vector<16x1xf32>
    %cst_54 = arith.constant 3.200000e+01 : f32
    %138 = vector.broadcast %cst_54 : f32 to vector<16x1xf32>
    %139 = arith.divf %137, %138 : vector<16x1xf32>
    %140 = vector.broadcast %132 : vector<16x1xf32> to vector<16x32xf32>
    %141 = arith.subf %128, %140 : vector<16x32xf32>
    %cst_55 = arith.constant 9.99999974E-6 : f32
    %142 = vector.broadcast %cst_55 : f32 to vector<16x1xf32>
    %143 = arith.addf %139, %142 : vector<16x1xf32>
    %144 = math.rsqrt %143 : vector<16x1xf32>
    %145 = vector.broadcast %144 : vector<16x1xf32> to vector<16x32xf32>
    %146 = arith.mulf %141, %145 : vector<16x32xf32>
    %147 = vector.broadcast %2 : vector<1x32xf32> to vector<16x32xf32>
    %148 = arith.mulf %146, %147 : vector<16x32xf32>
    %149 = vector.broadcast %3 : vector<1x32xf32> to vector<16x32xf32>
    %150 = arith.addf %148, %149 : vector<16x32xf32>
    %151 = arith.truncf %150 : vector<16x32xf32> to vector<16x32xbf16>
    %c0_56 = arith.constant 0 : index
    %c0_57 = arith.constant 0 : index
    %152 = vector.load %arg8[%c0_56, %c0_57] : memref<32x128xbf16, #tpu.memory_space<vmem>>, vector<32x128xbf16>
    %cst_58 = arith.constant dense<0.000000e+00> : vector<16x128xf32>
    %153 = tpu.matmul %151, %152, %cst_58 {dimension_numbers = #tpu.dot_dimension_numbers<[1], [0], [0], [1], [0, 0, 1, 1], [], []>} : vector<16x32xbf16>, vector<32x128xbf16>, vector<16x128xf32> -> vector<16x128xf32>
    %c0_59 = arith.constant 0 : index
    %c0_60 = arith.constant 0 : index
    %154 = vector.load %arg9[%c0_59, %c0_60] : memref<1x128xf32, #tpu.memory_space<vmem>>, vector<1x128xf32>
    %155 = vector.broadcast %154 : vector<1x128xf32> to vector<16x128xf32>
    %156 = arith.addf %153, %155 : vector<16x128xf32>
    %cst_61 = arith.constant 5.000000e-01 : f32
    %157 = vector.broadcast %cst_61 : f32 to vector<16x128xf32>
    %158 = arith.mulf %157, %156 : vector<16x128xf32>
    %cst_62 = arith.constant 4.471500e-02 : f32
    %159 = vector.broadcast %cst_62 : f32 to vector<16x128xf32>
    %160 = arith.mulf %159, %156 : vector<16x128xf32>
    %161 = arith.mulf %160, %156 : vector<16x128xf32>
    %162 = arith.mulf %161, %156 : vector<16x128xf32>
    %163 = arith.addf %156, %162 : vector<16x128xf32>
    %cst_63 = arith.constant 0.797884583 : f32
    %164 = vector.broadcast %cst_63 : f32 to vector<16x128xf32>
    %165 = arith.mulf %164, %163 : vector<16x128xf32>
    %166 = math.tanh %165 : vector<16x128xf32>
    %cst_64 = arith.constant 1.000000e+00 : f32
    %167 = vector.broadcast %cst_64 : f32 to vector<16x128xf32>
    %168 = arith.addf %167, %166 : vector<16x128xf32>
    %169 = arith.mulf %158, %168 : vector<16x128xf32>
    %170 = arith.truncf %169 : vector<16x128xf32> to vector<16x128xbf16>
    %c0_65 = arith.constant 0 : index
    %c0_66 = arith.constant 0 : index
    %171 = vector.load %arg10[%c0_65, %c0_66] : memref<128x32xbf16, #tpu.memory_space<vmem>>, vector<128x32xbf16>
    %cst_67 = arith.constant dense<0.000000e+00> : vector<16x32xf32>
    %172 = tpu.matmul %170, %171, %cst_67 {dimension_numbers = #tpu.dot_dimension_numbers<[1], [0], [0], [1], [0, 0, 1, 1], [], []>} : vector<16x128xbf16>, vector<128x32xbf16>, vector<16x32xf32> -> vector<16x32xf32>
    %c0_68 = arith.constant 0 : index
    %c0_69 = arith.constant 0 : index
    %173 = vector.load %arg11[%c0_68, %c0_69] : memref<1x32xf32, #tpu.memory_space<vmem>>, vector<1x32xf32>
    %174 = vector.broadcast %173 : vector<1x32xf32> to vector<16x32xf32>
    %175 = arith.addf %172, %174 : vector<16x32xf32>
    %176 = arith.addf %128, %175 : vector<16x32xf32>
    %177 = vector.shape_cast %176 : vector<16x32xf32> to vector<2x8x32xf32>
    %c0_70 = arith.constant 0 : index
    %c0_71 = arith.constant 0 : index
    %c0_72 = arith.constant 0 : index
    %178 = vector.load %arg12[%c0_70, %c0_71, %c0_72] : memref<2x8x32xf32, #tpu.memory_space<vmem>>, vector<2x8x32xf32>
    tpu.vector_store %arg12[%c0_70, %c0_71, %c0_72], %177 {strides = array<i32>} : memref<2x8x32xf32, #tpu.memory_space<vmem>>, vector<2x8x32xf32>,
    return
  }
  func.func @transform_0(%arg0: i32) -> (i32, i32, i32) {
    %c0_i32 = arith.constant 0 : i32
    %c0_i32_0 = arith.constant 0 : i32
    %c0_i32_1 = arith.constant 0 : i32
    return %arg0, %c0_i32, %c0_i32_0 : i32, i32, i32
  }
  func.func @transform_1(%arg0: i32) -> (i32, i32) {
    %c0_i32 = arith.constant 0 : i32
    %c0_i32_0 = arith.constant 0 : i32
    %c0_i32_1 = arith.constant 0 : i32
    return %c0_i32, %c0_i32_0 : i32, i32
  }
  func.func @transform_2(%arg0: i32) -> (i32, i32) {
    %c0_i32 = arith.constant 0 : i32
    %c0_i32_0 = arith.constant 0 : i32
    %c0_i32_1 = arith.constant 0 : i32
    return %c0_i32, %c0_i32_0 : i32, i32
  }
  func.func @transform_3(%arg0: i32) -> (i32, i32, i32) {
    %c0_i32 = arith.constant 0 : i32
    %c0_i32_0 = arith.constant 0 : i32
    %c0_i32_1 = arith.constant 0 : i32
    %c0_i32_2 = arith.constant 0 : i32
    return %c0_i32, %c0_i32_0, %c0_i32_1 : i32, i32, i32
  }
  func.func @transform_4(%arg0: i32) -> (i32, i32, i32) {
    %c0_i32 = arith.constant 0 : i32
    %c0_i32_0 = arith.constant 0 : i32
    %c0_i32_1 = arith.constant 0 : i32
    %c0_i32_2 = arith.constant 0 : i32
    return %c0_i32, %c0_i32_0, %c0_i32_1 : i32, i32, i32
  }
  func.func @transform_5(%arg0: i32) -> (i32, i32) {
    %c0_i32 = arith.constant 0 : i32
    %c0_i32_0 = arith.constant 0 : i32
    %c0_i32_1 = arith.constant 0 : i32
    return %c0_i32, %c0_i32_0 : i32, i32
  }
  func.func @transform_6(%arg0: i32) -> (i32, i32) {
    %c0_i32 = arith.constant 0 : i32
    %c0_i32_0 = arith.constant 0 : i32
    %c0_i32_1 = arith.constant 0 : i32
    return %c0_i32, %c0_i32_0 : i32, i32
  }
  func.func @transform_7(%arg0: i32) -> (i32, i32) {
    %c0_i32 = arith.constant 0 : i32
    %c0_i32_0 = arith.constant 0 : i32
    %c0_i32_1 = arith.constant 0 : i32
    return %c0_i32, %c0_i32_0 : i32, i32
  }
  func.func @transform_8(%arg0: i32) -> (i32, i32) {
    %c0_i32 = arith.constant 0 : i32
    %c0_i32_0 = arith.constant 0 : i32
    %c0_i32_1 = arith.constant 0 : i32
    return %c0_i32, %c0_i32_0 : i32, i32
  }
  func.func @transform_9(%arg0: i32) -> (i32, i32) {
    %c0_i32 = arith.constant 0 : i32
    %c0_i32_0 = arith.constant 0 : i32
    %c0_i32_1 = arith.constant 0 : i32
    return %c0_i32, %c0_i32_0 : i32, i32
  }
  func.func @transform_10(%arg0: i32) -> (i32, i32) {
    %c0_i32 = arith.constant 0 : i32
    %c0_i32_0 = arith.constant 0 : i32
    %c0_i32_1 = arith.constant 0 : i32
    return %c0_i32, %c0_i32_0 : i32, i32
  }
  func.func @transform_11(%arg0: i32) -> (i32, i32, i32) {
    %c0_i32 = arith.constant 0 : i32
    %c0_i32_0 = arith.constant 0 : i32
    %c0_i32_1 = arith.constant 0 : i32
    return %arg0, %c0_i32, %c0_i32_0 : i32, i32, i32
  }
}

</mosaic_0001>

<llo_original>
// kernel: tpu_custom_call.1
$region0: #{tpu_custom_call.1}
  #allocation0 [shape = 'u32[]', space=smem, size = 0x4, offset = 0x4, fixed_abs, tag = 'smem constant byte address 0x4 - core index']
  #allocation1 [shape = 'u32[144,128]{1,0:T(1,128)}', space=vmem, size = 0x12000, scoped, tag = 'internal scratch']
  %s0 = inlined_call_operand.vmem [shape: f32[2,8,32], index: 0, kind: input, shape index: {}]
  %s1 = inlined_call_operand.vmem [shape: f32[1,32], index: 1, kind: input, shape index: {}]
  %s2 = inlined_call_operand.vmem [shape: f32[1,32], index: 2, kind: input, shape index: {}]
  %s3 = inlined_call_operand.vmem [shape: bf16[3,32,32], index: 3, kind: input, shape index: {}]
  %s4 = inlined_call_operand.vmem [shape: f32[3,1,32], index: 4, kind: input, shape index: {}]
  %s5 = inlined_call_operand.vmem [shape: bf16[32,32], index: 5, kind: input, shape index: {}]
  %s6 = inlined_call_operand.vmem [shape: f32[1,32], index: 6, kind: input, shape index: {}]
  %s7 = inlined_call_operand.hbm [shape: bf16[32,128], index: 7, kind: input, shape index: {}]
  %s8 = inlined_call_operand.vmem [shape: f32[1,128], index: 8, kind: input, shape index: {}]
  %s9 = inlined_call_operand.vmem [shape: bf16[128,32], index: 9, kind: input, shape index: {}]
  %s10 = inlined_call_operand.vmem [shape: f32[1,32], index: 10, kind: input, shape index: {}]
  %s11 = inlined_call_operand.hbm [shape: f32[2,8,32], index: 11, kind: output, shape index: {}]
  %s12 = sld [smem:[#allocation0]]
  $region58: #{tpu_custom_call.1} parent=0
    _
  %s14 = ssub.s32 1, %s12
  %s15 = scalar_select 0, %s14, %s12
  $region1: #{tpu_custom_call.1} parent=0
    #allocation2 [shape = 'u8[8192]{0}', space=vmem, size = 0x2000, scoped, tag = 'input window, operand 7, single buffered']
    #allocation3 [shape = 's32[1]{0}', space=sflag, size = 0x4, scoped, tag = 'scoped memory for tpu_custom_call.1']
    #allocation4 [shape = 's32[1]{0}', space=sflag, size = 0x4, scoped, tag = 'scoped memory for tpu_custom_call.1']
    #allocation5 [shape = 'u8[8192]{0}', space=vmem, size = 0x2000, scoped, tag = 'output window, operand 0, single buffered']
    %16 = vsyncpa [#allocation3], 0
    %17 = vsyncpa [#allocation4], 0
    // Predicated region
    $region2: #{tpu_custom_call.1} parent=1 // pred_check
      _
    $region3: #{tpu_custom_call.1} parent=1 // pred_check_branch
      %19 = sbr.rel (0) target = $region5
    $region4: #{tpu_custom_call.1} parent=1 // pred_region
      _
    $region5: #{tpu_custom_call.1} parent=1 // pred_fallthru
      _
    // Predicated region
    $region6: #{tpu_custom_call.1} parent=1 // pred_check
      _
    $region7: #{tpu_custom_call.1} parent=1 // pred_check_branch
      %21 = sbr.rel (0) target = $region9
    $region8: #{tpu_custom_call.1} parent=1 // pred_region
      _
    $region9: #{tpu_custom_call.1} parent=1 // pred_fallthru
      _
    // Predicated region
    $region10: #{tpu_custom_call.1} parent=1 // pred_check
      _
    $region11: #{tpu_custom_call.1} parent=1 // pred_check_branch
      %23 = sbr.rel (0) target = $region13
    $region12: #{tpu_custom_call.1} parent=1 // pred_region
      _
    $region13: #{tpu_custom_call.1} parent=1 // pred_fallthru
      _
    // Predicated region
    $region14: #{tpu_custom_call.1} parent=1 // pred_check
      _
    $region15: #{tpu_custom_call.1} parent=1 // pred_check_branch
      %25 = sbr.rel (0) target = $region17
    $region16: #{tpu_custom_call.1} parent=1 // pred_region
      _
    $region17: #{tpu_custom_call.1} parent=1 // pred_fallthru
      _
    // Predicated region
    $region18: #{tpu_custom_call.1} parent=1 // pred_check
      _
    $region19: #{tpu_custom_call.1} parent=1 // pred_check_branch
      %27 = sbr.rel (0) target = $region21
    $region20: #{tpu_custom_call.1} parent=1 // pred_region
      _
    $region21: #{tpu_custom_call.1} parent=1 // pred_fallthru
      _
    // Predicated region
    $region22: #{tpu_custom_call.1} parent=1 // pred_check
      _
    $region23: #{tpu_custom_call.1} parent=1 // pred_check_branch
      %29 = sbr.rel (0) target = $region25
    $region24: #{tpu_custom_call.1} parent=1 // pred_region
      _
    $region25: #{tpu_custom_call.1} parent=1 // pred_fallthru
      _
    // Predicated region
    $region26: #{tpu_custom_call.1} parent=1 // pred_check
      _
    $region27: #{tpu_custom_call.1} parent=1 // pred_check_branch
      %31 = sbr.rel (0) target = $region29
    $region28: #{tpu_custom_call.1} parent=1 // pred_region
      _
    $region29: #{tpu_custom_call.1} parent=1 // pred_fallthru
      _
    // Predicated region
    $region30: #{tpu_custom_call.1} parent=1 // pred_check
      _
    $region31: #{tpu_custom_call.1} parent=1 // pred_check_branch
      %33 = sbr.rel (0) target = $region33
    $region32: #{tpu_custom_call.1} parent=1 // pred_region
      %s35 = ssub.s32 256, 256
      %36 = vsyncadd [#allocation3], %s35
      %s37 = sshll.u32 [#allocation2], 4
      %s38 = int_to_ptr.vmem [resolvable:$true] %s37
      %43 = dma.hbm_to_vmem [thread:$0]  %s7, 256, %s38, [#allocation3], 64, 64, 4
    $region33: #{tpu_custom_call.1} parent=1 // pred_fallthru
      _
    // Predicated region
    $region34: #{tpu_custom_call.1} parent=1 // pred_check
      _
    $region35: #{tpu_custom_call.1} parent=1 // pred_check_branch
      %45 = sbr.rel (0) target = $region37
    $region36: #{tpu_custom_call.1} parent=1 // pred_region
      _
    $region37: #{tpu_custom_call.1} parent=1 // pred_fallthru
      _
    // Predicated region
    $region38: #{tpu_custom_call.1} parent=1 // pred_check
      _
    $region39: #{tpu_custom_call.1} parent=1 // pred_check_branch
      %47 = sbr.rel (0) target = $region41
    $region40: #{tpu_custom_call.1} parent=1 // pred_region
      _
    $region41: #{tpu_custom_call.1} parent=1 // pred_fallthru
      _
    // Predicated region
    $region42: #{tpu_custom_call.1} parent=1 // pred_check
      _
    $region43: #{tpu_custom_call.1} parent=1 // pred_check_branch
      %49 = sbr.rel (0) target = $region45
    $region44: #{tpu_custom_call.1} parent=1 // pred_region
      _
    $region45: #{tpu_custom_call.1} parent=1 // pred_fallthru
      _
    // Predicated region
    $region46: #{tpu_custom_call.1} parent=1 // pred_check
      _
    $region47: #{tpu_custom_call.1} parent=1 // pred_check_branch
      %51 = sbr.rel (0) target = $region49
    $region48: #{tpu_custom_call.1} parent=1 // pred_region
      %52 = dma.done [#allocation3], 256
    $region49: #{tpu_custom_call.1} parent=1 // pred_fallthru
      _
    %v54 = vld [vmem:[%s0] sm:$0xff]
    %v55 = vld [vmem:[%s0 + $0x8] sm:$0xff]
    %v56 = vld [vmem:[%s1] sm:$0x1]
    %v57 = vld [vmem:[%s2] sm:$0x1]
    %vm58 = vcmask 261120
    %v59 = vsel %vm58, %v54, 0.0
    %60 = vadd.xlane.f32.xlu0 %v59
    %v61 = vpop.xlane.xlu0 %60
    %v62 = vsel %vm58, %v55, 0.0
    %63 = vadd.xlane.f32.xlu0 %v62
    %v64 = vpop.xlane.xlu0 %63
    %v65 = vrcp.pop 32.0
    %v66 = vmul.f32 %v61, %v65
    %v67 = vmul.f32 %v64, %v65
    %v68 = vsub.f32 %v54, %v66
    %v69 = vsub.f32 %v55, %v67
    %v70 = vmul.f32 %v68, %v68
    %v71 = vmul.f32 %v69, %v69
    %v72 = vsel %vm58, %v70, 0.0
    %73 = vadd.xlane.f32.xlu0 %v72
    %v74 = vpop.xlane.xlu0 %73
    %v75 = vsel %vm58, %v71, 0.0
    %76 = vadd.xlane.f32.xlu0 %v75
    %v77 = vpop.xlane.xlu0 %76
    %v78 = vmul.f32 %v74, %v65
    %v79 = vmul.f32 %v77, %v65
    %v80 = vadd.f32 %v78, 1e-05
    %v81 = vadd.f32 %v79, 1e-05
    %v82 = vrsqrt.pop %v80
    %v83 = vrsqrt.pop %v81
    %v84 = vmul.f32 %v68, %v82
    %v85 = vmul.f32 %v69, %v83
    %v87 = vlaneseq
    %v88 = vshrl.u32 %v87, 7
    %v89 = vsub.s32 0, %v88
    %v90 = vrot.slane %v56, %v89
    %v92 = vmul.f32 %v84, %v90
    %v93 = vmul.f32 %v85, %v90
    %v95 = vlaneseq
    %v96 = vshrl.u32 %v95, 7
    %v97 = vsub.s32 0, %v96
    %v98 = vrot.slane %v57, %v97
    %v100 = vadd.f32 %v92, %v98
    %v101 = vadd.f32 %v93, %v98
    %v102 = vpack.c.bf16 %v101, %v100
    %v103 = vld [vmem:[%s3] sm:$0xf]
    %v104 = vld [vmem:[%s3 + $0x4] sm:$0xf]
    %v105 = vld [vmem:[%s3 + $0x8] sm:$0xf]
    %v106 = vld [vmem:[%s3 + $0xc] sm:$0xf]
    %v107 = vld [vmem:[%s4] sm:$0x1]
    %v109 = vlaneseq
    %v110 = vshrl.u32 %v109, 7
    %v111 = vsub.s32 0, %v110
    %v112 = vrot.slane %v107, %v111
    %v118 = vunpack.c.l.b16 %v103
    %v119 = vunpack.c.l.b16 %v104
    %v120 = vunpack.c.l.b16 %v105
    %v121 = vunpack.c.l.b16 %v106
    %v122 = vpack.c.b16 %v119, %v118
    %v123 = vpack.c.b16 %v121, %v120
    %v127 = vsel %vm58, %v102, 0
    %129 = vmatprep.subr.bf16.mxu0 0
    %130 = vmatpush1.bf16.msra.mxu0 %v122
    %131 = vmatprep.subr.bf16.mxu0 0
    %132 = vmatpush1.bf16.msra.mxu0 %v123
    %133 = vmatprep.subr.bf16.mxu0 0
    %134 = vmatpush1.bf16.msra.mxu0 0
    %135 = vmatprep.subr.bf16.mxu0 0
    %136 = vmatpush1.bf16.msra.mxu0 0
    %137 = vmatprep.subr.bf16.mxu0 0
    %138 = vmatpush1.bf16.msra.mxu0 0
    %139 = vmatprep.subr.bf16.mxu0 0
    %140 = vmatpush1.bf16.msra.mxu0 0
    %141 = vmatprep.subr.bf16.mxu0 0
    %142 = vmatpush1.bf16.msra.mxu0 0
    %143 = vmatprep.subr.bf16.mxu0 0
    %144 = vmatpush1.bf16.msra.mxu0 0
    %145 = vmatprep.subr.bf16.mxu0 0
    %146 = vmatpush1.bf16.msra.mxu0 0
    %147 = vmatprep.subr.bf16.mxu0 0
    %148 = vmatpush1.bf16.msra.mxu0 0
    %149 = vmatprep.subr.bf16.mxu0 0
    %150 = vmatpush1.bf16.msra.mxu0 0
    %151 = vmatprep.subr.bf16.mxu0 0
    %152 = vmatpush1.bf16.msra.mxu0 0
    %153 = vmatprep.subr.bf16.mxu0 0
    %154 = vmatpush1.bf16.msra.mxu0 0
    %155 = vmatprep.subr.bf16.mxu0 0
    %156 = vmatpush1.bf16.msra.mxu0 0
    %157 = vmatprep.subr.bf16.mxu0 0
    %158 = vmatpush1.bf16.msra.mxu0 0
    %159 = vmatprep.subr.bf16.mxu0 0
    %160 = vmatpush1.bf16.msra.mxu0 0
    %161 = vmatprep.mubr.bf16.mxu0 0
    %162 = vmatmul.mubr.bf16.gmra.mrb[0].mxu0 %v127
    %v163 = vpop.f32.mrb[0].mxu0
    %v164 = vadd.f32 %v112, %v163
    %v165 = vpop.f32.mrb[0].mxu0
    %v166 = vpop.f32.mrb[0].mxu0
    %v167 = vadd.f32 %v112, %v166
    %v168 = vpop.f32.mrb[0].mxu0
    %169 = vdwg.mxu0
    %s170 = scalar_lea.vmem %s3, 16
    %v171 = vld [vmem:[%s170] sm:$0xf]
    %v172 = vld [vmem:[%s170 + $0x4] sm:$0xf]
    %v173 = vld [vmem:[%s170 + $0x8] sm:$0xf]
    %v174 = vld [vmem:[%s170 + $0xc] sm:$0xf]
    %s175 = scalar_lea.vmem %s4, 1
    %v176 = vld [vmem:[%s175] sm:$0x1]
    %v178 = vlaneseq
    %v179 = vshrl.u32 %v178, 7
    %v180 = vsub.s32 0, %v179
    %v181 = vrot.slane %v176, %v180
    %v187 = vunpack.c.l.b16 %v171
    %v188 = vunpack.c.l.b16 %v172
    %v189 = vunpack.c.l.b16 %v173
    %v190 = vunpack.c.l.b16 %v174
    %v191 = vpack.c.b16 %v188, %v187
    %v192 = vpack.c.b16 %v190, %v189
    %195 = vmatprep.subr.bf16.mxu0 0
    %196 = vmatpush1.bf16.msra.mxu0 %v191
    %197 = vmatprep.subr.bf16.mxu0 0
    %198 = vmatpush1.bf16.msra.mxu0 %v192
    %199 = vmatprep.subr.bf16.mxu0 0
    %200 = vmatpush1.bf16.msra.mxu0 0
    %201 = vmatprep.subr.bf16.mxu0 0
    %202 = vmatpush1.bf16.msra.mxu0 0
    %203 = vmatprep.subr.bf16.mxu0 0
    %204 = vmatpush1.bf16.msra.mxu0 0
    %205 = vmatprep.subr.bf16.mxu0 0
    %206 = vmatpush1.bf16.msra.mxu0 0
    %207 = vmatprep.subr.bf16.mxu0 0
    %208 = vmatpush1.bf16.msra.mxu0 0
    %209 = vmatprep.subr.bf16.mxu0 0
    %210 = vmatpush1.bf16.msra.mxu0 0
    %211 = vmatprep.subr.bf16.mxu0 0
    %212 = vmatpush1.bf16.msra.mxu0 0
    %213 = vmatprep.subr.bf16.mxu0 0
    %214 = vmatpush1.bf16.msra.mxu0 0
    %215 = vmatprep.subr.bf16.mxu0 0
    %216 = vmatpush1.bf16.msra.mxu0 0
    %217 = vmatprep.subr.bf16.mxu0 0
    %218 = vmatpush1.bf16.msra.mxu0 0
    %219 = vmatprep.subr.bf16.mxu0 0
    %220 = vmatpush1.bf16.msra.mxu0 0
    %221 = vmatprep.subr.bf16.mxu0 0
    %222 = vmatpush1.bf16.msra.mxu0 0
    %223 = vmatprep.subr.bf16.mxu0 0
    %224 = vmatpush1.bf16.msra.mxu0 0
    %225 = vmatprep.subr.bf16.mxu0 0
    %226 = vmatpush1.bf16.msra.mxu0 0
    %227 = vmatprep.mubr.bf16.mxu0 0
    %228 = vmatmul.mubr.bf16.gmra.mrb[0].mxu0 %v127
    %v229 = vpop.f32.mrb[0].mxu0
    %v230 = vadd.f32 %v181, %v229
    %v231 = vpop.f32.mrb[0].mxu0
    %v232 = vpop.f32.mrb[0].mxu0
    %v233 = vadd.f32 %v181, %v232
    %v234 = vpop.f32.mrb[0].mxu0
    %235 = vdwg.mxu0
    %s236 = scalar_lea.vmem %s3, 32
    %v237 = vld [vmem:[%s236] sm:$0xf]
    %v238 = vld [vmem:[%s236 + $0x4] sm:$0xf]
    %v239 = vld [vmem:[%s236 + $0x8] sm:$0xf]
    %v240 = vld [vmem:[%s236 + $0xc] sm:$0xf]
    %s241 = scalar_lea.vmem %s4, 2
    %v242 = vld [vmem:[%s241] sm:$0x1]
    %v244 = vlaneseq
    %v245 = vshrl.u32 %v244, 7
    %v246 = vsub.s32 0, %v245
    %v247 = vrot.slane %v242, %v246
    %v253 = vunpack.c.l.b16 %v237
    %v254 = vunpack.c.l.b16 %v238
    %v255 = vunpack.c.l.b16 %v239
    %v256 = vunpack.c.l.b16 %v240
    %v257 = vpack.c.b16 %v254, %v253
    %v258 = vpack.c.b16 %v256, %v255
    %261 = vmatprep.subr.bf16.mxu0 0
    %262 = vmatpush1.bf16.msra.mxu0 %v257
    %263 = vmatprep.subr.bf16.mxu0 0
    %264 = vmatpush1.bf16.msra.mxu0 %v258
    %265 = vmatprep.subr.bf16.mxu0 0
    %266 = vmatpush1.bf16.msra.mxu0 0
    %267 = vmatprep.subr.bf16.mxu0 0
    %268 = vmatpush1.bf16.msra.mxu0 0
    %269 = vmatprep.subr.bf16.mxu0 0
    %270 = vmatpush1.bf16.msra.mxu0 0
    %271 = vmatprep.subr.bf16.mxu0 0
    %272 = vmatpush1.bf16.msra.mxu0 0
    %273 = vmatprep.subr.bf16.mxu0 0
    %274 = vmatpush1.bf16.msra.mxu0 0
    %275 = vmatprep.subr.bf16.mxu0 0
    %276 = vmatpush1.bf16.msra.mxu0 0
    %277 = vmatprep.subr.bf16.mxu0 0
    %278 = vmatpush1.bf16.msra.mxu0 0
    %279 = vmatprep.subr.bf16.mxu0 0
    %280 = vmatpush1.bf16.msra.mxu0 0
    %281 = vmatprep.subr.bf16.mxu0 0
    %282 = vmatpush1.bf16.msra.mxu0 0
    %283 = vmatprep.subr.bf16.mxu0 0
    %284 = vmatpush1.bf16.msra.mxu0 0
    %285 = vmatprep.subr.bf16.mxu0 0
    %286 = vmatpush1.bf16.msra.mxu0 0
    %287 = vmatprep.subr.bf16.mxu0 0
    %288 = vmatpush1.bf16.msra.mxu0 0
    %289 = vmatprep.subr.bf16.mxu0 0
    %290 = vmatpush1.bf16.msra.mxu0 0
    %291 = vmatprep.subr.bf16.mxu0 0
    %292 = vmatpush1.bf16.msra.mxu0 0
    %293 = vmatprep.mubr.bf16.mxu0 0
    %294 = vmatmul.mubr.bf16.gmra.mrb[0].mxu0 %v127
    %v295 = vpop.f32.mrb[0].mxu0
    %v296 = vadd.f32 %v247, %v295
    %v297 = vpop.f32.mrb[0].mxu0
    %v298 = vpop.f32.mrb[0].mxu0
    %v299 = vadd.f32 %v247, %v298
    %v300 = vpop.f32.mrb[0].mxu0
    %301 = vdwg.mxu0
    %v302 = vmul.f32 %v164, 0.35355338
    %v303 = vmul.f32 %v167, 0.35355338
    %v304 = vpack.c.bf16 %v303, %v302
    %v306 = vunpack.c.l.b16 %v304
    %v307 = vunpack.c.h.b16 %v304
    %v308 = vpack.c.b16 %v306, %v306
    %v309 = vpack.c.b16 %v307, %v307
    %v310 = vpack.c.bf16 %v233, %v230
    %v312 = vunpack.c.l.b16 %v310
    %v313 = vunpack.c.h.b16 %v310
    %v314 = vpack.c.b16 %v312, %v312
    %v315 = vpack.c.b16 %v313, %v313
    %v316 = vpack.c.bf16 %v299, %v296
    %v318 = vunpack.c.l.b16 %v316
    %v319 = vunpack.c.h.b16 %v316
    %v320 = vpack.c.b16 %v318, %v318
    %v321 = vpack.c.b16 %v319, %v319
    %vm322 = vcmask 64512
    %v324 = vsel %vm322, %v308, 0
    %v327 = vsel %vm322, %v314, 0
    %329 = vmatprep.subr.bf16.mxu0 0
    %330 = vmatpush1.bf16.xpose.msra.mxu0 %v327
    %331 = vmatprep.subr.bf16.mxu0 0
    %332 = vmatpush1.bf16.xpose.msra.mxu0 0
    %333 = vmatprep.subr.bf16.mxu0 0
    %334 = vmatpush1.bf16.xpose.msra.mxu0 0
    %335 = vmatprep.subr.bf16.mxu0 0
    %336 = vmatpush1.bf16.xpose.msra.mxu0 0
    %337 = vmatprep.subr.bf16.mxu0 0
    %338 = vmatpush1.bf16.xpose.msra.mxu0 0
    %339 = vmatprep.subr.bf16.mxu0 0
    %340 = vmatpush1.bf16.xpose.msra.mxu0 0
    %341 = vmatprep.subr.bf16.mxu0 0
    %342 = vmatpush1.bf16.xpose.msra.mxu0 0
    %343 = vmatprep.subr.bf16.mxu0 0
    %344 = vmatpush1.bf16.xpose.msra.mxu0 0
    %345 = vmatprep.subr.bf16.mxu0 0
    %346 = vmatpush1.bf16.xpose.msra.mxu0 0
    %347 = vmatprep.subr.bf16.mxu0 0
    %348 = vmatpush1.bf16.xpose.msra.mxu0 0
    %349 = vmatprep.subr.bf16.mxu0 0
    %350 = vmatpush1.bf16.xpose.msra.mxu0 0
    %351 = vmatprep.subr.bf16.mxu0 0
    %352 = vmatpush1.bf16.xpose.msra.mxu0 0
    %353 = vmatprep.subr.bf16.mxu0 0
    %354 = vmatpush1.bf16.xpose.msra.mxu0 0
    %355 = vmatprep.subr.bf16.mxu0 0
    %356 = vmatpush1.bf16.xpose.msra.mxu0 0
    %357 = vmatprep.subr.bf16.mxu0 0
    %358 = vmatpush1.bf16.xpose.msra.mxu0 0
    %359 = vmatprep.subr.bf16.mxu0 0
    %360 = vmatpush1.bf16.xpose.msra.mxu0 0
    %361 = vmatprep.mubr.bf16.mxu0 0
    %362 = vmatmul.mubr.bf16.gmra.mrb[0].mxu0 %v324
    %v363 = vpop.f32.mrb[0].mxu0
    %v364 = vadd.f32 0.0, %v363
    %v365 = vpop.f32.mrb[0].mxu0
    %v366 = vpop.f32.mrb[0].mxu0
    %v367 = vpop.f32.mrb[0].mxu0
    %368 = vdwg.mxu0
    %v370 = vsel %vm322, %v309, 0
    %v373 = vsel %vm322, %v315, 0
    %375 = vmatprep.subr.bf16.mxu0 0
    %376 = vmatpush1.bf16.xpose.msra.mxu0 %v373
    %377 = vmatprep.subr.bf16.mxu0 0
    %378 = vmatpush1.bf16.xpose.msra.mxu0 0
    %379 = vmatprep.subr.bf16.mxu0 0
    %380 = vmatpush1.bf16.xpose.msra.mxu0 0
    %381 = vmatprep.subr.bf16.mxu0 0
    %382 = vmatpush1.bf16.xpose.msra.mxu0 0
    %383 = vmatprep.subr.bf16.mxu0 0
    %384 = vmatpush1.bf16.xpose.msra.mxu0 0
    %385 = vmatprep.subr.bf16.mxu0 0
    %386 = vmatpush1.bf16.xpose.msra.mxu0 0
    %387 = vmatprep.subr.bf16.mxu0 0
    %388 = vmatpush1.bf16.xpose.msra.mxu0 0
    %389 = vmatprep.subr.bf16.mxu0 0
    %390 = vmatpush1.bf16.xpose.msra.mxu0 0
    %391 = vmatprep.subr.bf16.mxu0 0
    %392 = vmatpush1.bf16.xpose.msra.mxu0 0
    %393 = vmatprep.subr.bf16.mxu0 0
    %394 = vmatpush1.bf16.xpose.msra.mxu0 0
    %395 = vmatprep.subr.bf16.mxu0 0
    %396 = vmatpush1.bf16.xpose.msra.mxu0 0
    %397 = vmatprep.subr.bf16.mxu0 0
    %398 = vmatpush1.bf16.xpose.msra.mxu0 0
    %399 = vmatprep.subr.bf16.mxu0 0
    %400 = vmatpush1.bf16.xpose.msra.mxu0 0
    %401 = vmatprep.subr.bf16.mxu0 0
    %402 = vmatpush1.bf16.xpose.msra.mxu0 0
    %403 = vmatprep.subr.bf16.mxu0 0
    %404 = vmatpush1.bf16.xpose.msra.mxu0 0
    %405 = vmatprep.subr.bf16.mxu0 0
    %406 = vmatpush1.bf16.xpose.msra.mxu0 0
    %407 = vmatprep.mubr.bf16.mxu0 0
    %408 = vmatmul.mubr.bf16.gmra.mrb[0].mxu0 %v370
    %v409 = vpop.f32.mrb[0].mxu0
    %v410 = vadd.f32 0.0, %v409
    %v411 = vpop.f32.mrb[0].mxu0
    %v412 = vpop.f32.mrb[0].mxu0
    %v413 = vpop.f32.mrb[0].mxu0
    %414 = vdwg.mxu0
    %v415 = vsel %vm322, %v364, -inf
    %416 = vmax.xlane.f32.xlu0 %v415
    %v417 = vpop.xlane.xlu0 %416
    %v418 = vsel %vm322, %v410, -inf
    %419 = vmax.xlane.f32.xlu0 %v418
    %v420 = vpop.xlane.xlu0 %419
    %v421 = vsub.f32 %v364, %v417
    %v422 = vsub.f32 %v410, %v420
    %v423 = vmul.f32 %v421, 1.442695
    %v424 = vpow.pop %v423
    %v425 = vmul.f32 %v422, 1.442695
    %v426 = vpow.pop %v425
    %v427 = vsel %vm322, %v424, 0.0
    %428 = vadd.xlane.f32.xlu0 %v427
    %v429 = vpop.xlane.xlu0 %428
    %v430 = vsel %vm322, %v426, 0.0
    %431 = vadd.xlane.f32.xlu0 %v430
    %v432 = vpop.xlane.xlu0 %431
    %v433 = vrcp.pop %v429
    %v434 = vrcp.pop %v432
    %v435 = vmul.f32 %v424, %v433
    %v436 = vmul.f32 %v426, %v434
    %v437 = vpack.c.bf16 %v435, %v435
    %v438 = vpack.c.bf16 %v436, %v436
    %v440 = vsel %vm322, %v437, 0
    %vm442 = vcmask 1043456
    %v444 = vsel %vm442, %v320, 0
    %446 = vmatprep.subr.bf16.mxu0 0
    %447 = vmatpush1.bf16.msra.mxu0 %v444
    %448 = vmatprep.subr.bf16.mxu0 0
    %449 = vmatpush1.bf16.msra.mxu0 0
    %450 = vmatprep.subr.bf16.mxu0 0
    %451 = vmatpush1.bf16.msra.mxu0 0
    %452 = vmatprep.subr.bf16.mxu0 0
    %453 = vmatpush1.bf16.msra.mxu0 0
    %454 = vmatprep.subr.bf16.mxu0 0
    %455 = vmatpush1.bf16.msra.mxu0 0
    %456 = vmatprep.subr.bf16.mxu0 0
    %457 = vmatpush1.bf16.msra.mxu0 0
    %458 = vmatprep.subr.bf16.mxu0 0
    %459 = vmatpush1.bf16.msra.mxu0 0
    %460 = vmatprep.subr.bf16.mxu0 0
    %461 = vmatpush1.bf16.msra.mxu0 0
    %462 = vmatprep.subr.bf16.mxu0 0
    %463 = vmatpush1.bf16.msra.mxu0 0
    %464 = vmatprep.subr.bf16.mxu0 0
    %465 = vmatpush1.bf16.msra.mxu0 0
    %466 = vmatprep.subr.bf16.mxu0 0
    %467 = vmatpush1.bf16.msra.mxu0 0
    %468 = vmatprep.subr.bf16.mxu0 0
    %469 = vmatpush1.bf16.msra.mxu0 0
    %470 = vmatprep.subr.bf16.mxu0 0
    %471 = vmatpush1.bf16.msra.mxu0 0
    %472 = vmatprep.subr.bf16.mxu0 0
    %473 = vmatpush1.bf16.msra.mxu0 0
    %474 = vmatprep.subr.bf16.mxu0 0
    %475 = vmatpush1.bf16.msra.mxu0 0
    %476 = vmatprep.subr.bf16.mxu0 0
    %477 = vmatpush1.bf16.msra.mxu0 0
    %478 = vmatprep.mubr.bf16.mxu0 0
    %479 = vmatmul.mubr.bf16.gmra.mrb[0].mxu0 %v440
    %v480 = vpop.f32.mrb[0].mxu0
    %v481 = vadd.f32 0.0, %v480
    %v482 = vpop.f32.mrb[0].mxu0
    %v483 = vpop.f32.mrb[0].mxu0
    %v484 = vpop.f32.mrb[0].mxu0
    %485 = vdwg.mxu0
    %v487 = vsel %vm322, %v438, 0
    %v490 = vsel %vm442, %v321, 0
    %492 = vmatprep.subr.bf16.mxu0 0
    %493 = vmatpush1.bf16.msra.mxu0 %v490
    %494 = vmatprep.subr.bf16.mxu0 0
    %495 = vmatpush1.bf16.msra.mxu0 0
    %496 = vmatprep.subr.bf16.mxu0 0
    %497 = vmatpush1.bf16.msra.mxu0 0
    %498 = vmatprep.subr.bf16.mxu0 0
    %499 = vmatpush1.bf16.msra.mxu0 0
    %500 = vmatprep.subr.bf16.mxu0 0
    %501 = vmatpush1.bf16.msra.mxu0 0
    %502 = vmatprep.subr.bf16.mxu0 0
    %503 = vmatpush1.bf16.msra.mxu0 0
    %504 = vmatprep.subr.bf16.mxu0 0
    %505 = vmatpush1.bf16.msra.mxu0 0
    %506 = vmatprep.subr.bf16.mxu0 0
    %507 = vmatpush1.bf16.msra.mxu0 0
    %508 = vmatprep.subr.bf16.mxu0 0
    %509 = vmatpush1.bf16.msra.mxu0 0
    %510 = vmatprep.subr.bf16.mxu0 0
    %511 = vmatpush1.bf16.msra.mxu0 0
    %512 = vmatprep.subr.bf16.mxu0 0
    %513 = vmatpush1.bf16.msra.mxu0 0
    %514 = vmatprep.subr.bf16.mxu0 0
    %515 = vmatpush1.bf16.msra.mxu0 0
    %516 = vmatprep.subr.bf16.mxu0 0
    %517 = vmatpush1.bf16.msra.mxu0 0
    %518 = vmatprep.subr.bf16.mxu0 0
    %519 = vmatpush1.bf16.msra.mxu0 0
    %520 = vmatprep.subr.bf16.mxu0 0
    %521 = vmatpush1.bf16.msra.mxu0 0
    %522 = vmatprep.subr.bf16.mxu0 0
    %523 = vmatpush1.bf16.msra.mxu0 0
    %524 = vmatprep.mubr.bf16.mxu0 0
    %525 = vmatmul.mubr.bf16.gmra.mrb[0].mxu0 %v487
    %v526 = vpop.f32.mrb[0].mxu0
    %v527 = vadd.f32 0.0, %v526
    %v528 = vpop.f32.mrb[0].mxu0
    %v529 = vpop.f32.mrb[0].mxu0
    %v530 = vpop.f32.mrb[0].mxu0
    %531 = vdwg.mxu0
    %532 = vrot.lane.b32.xlu0 %v308, 120
    %v533 = vpop.permute.xlu0 %532
    %534 = vrot.lane.b32.xlu0 %v314, 120
    %v535 = vpop.permute.xlu0 %534
    %v537 = vsel %vm322, %v533, 0
    %v540 = vsel %vm322, %v535, 0
    %542 = vmatprep.subr.bf16.mxu0 0
    %543 = vmatpush1.bf16.xpose.msra.mxu0 %v540
    %544 = vmatprep.subr.bf16.mxu0 0
    %545 = vmatpush1.bf16.xpose.msra.mxu0 0
    %546 = vmatprep.subr.bf16.mxu0 0
    %547 = vmatpush1.bf16.xpose.msra.mxu0 0
    %548 = vmatprep.subr.bf16.mxu0 0
    %549 = vmatpush1.bf16.xpose.msra.mxu0 0
    %550 = vmatprep.subr.bf16.mxu0 0
    %551 = vmatpush1.bf16.xpose.msra.mxu0 0
    %552 = vmatprep.subr.bf16.mxu0 0
    %553 = vmatpush1.bf16.xpose.msra.mxu0 0
    %554 = vmatprep.subr.bf16.mxu0 0
    %555 = vmatpush1.bf16.xpose.msra.mxu0 0
    %556 = vmatprep.subr.bf16.mxu0 0
    %557 = vmatpush1.bf16.xpose.msra.mxu0 0
    %558 = vmatprep.subr.bf16.mxu0 0
    %559 = vmatpush1.bf16.xpose.msra.mxu0 0
    %560 = vmatprep.subr.bf16.mxu0 0
    %561 = vmatpush1.bf16.xpose.msra.mxu0 0
    %562 = vmatprep.subr.bf16.mxu0 0
    %563 = vmatpush1.bf16.xpose.msra.mxu0 0
    %564 = vmatprep.subr.bf16.mxu0 0
    %565 = vmatpush1.bf16.xpose.msra.mxu0 0
    %566 = vmatprep.subr.bf16.mxu0 0
    %567 = vmatpush1.bf16.xpose.msra.mxu0 0
    %568 = vmatprep.subr.bf16.mxu0 0
    %569 = vmatpush1.bf16.xpose.msra.mxu0 0
    %570 = vmatprep.subr.bf16.mxu0 0
    %571 = vmatpush1.bf16.xpose.msra.mxu0 0
    %572 = vmatprep.subr.bf16.mxu0 0
    %573 = vmatpush1.bf16.xpose.msra.mxu0 0
    %574 = vmatprep.mubr.bf16.mxu0 0
    %575 = vmatmul.mubr.bf16.gmra.mrb[0].mxu0 %v537
    %v576 = vpop.f32.mrb[0].mxu0
    %v577 = vadd.f32 0.0, %v576
    %v578 = vpop.f32.mrb[0].mxu0
    %v579 = vpop.f32.mrb[0].mxu0
    %v580 = vpop.f32.mrb[0].mxu0
    %581 = vdwg.mxu0
    %582 = vrot.lane.b32.xlu0 %v309, 120
    %v583 = vpop.permute.xlu0 %582
    %584 = vrot.lane.b32.xlu0 %v315, 120
    %v585 = vpop.permute.xlu0 %584
    %v587 = vsel %vm322, %v583, 0
    %v590 = vsel %vm322, %v585, 0
    %592 = vmatprep.subr.bf16.mxu0 0
    %593 = vmatpush1.bf16.xpose.msra.mxu0 %v590
    %594 = vmatprep.subr.bf16.mxu0 0
    %595 = vmatpush1.bf16.xpose.msra.mxu0 0
    %596 = vmatprep.subr.bf16.mxu0 0
    %597 = vmatpush1.bf16.xpose.msra.mxu0 0
    %598 = vmatprep.subr.bf16.mxu0 0
    %599 = vmatpush1.bf16.xpose.msra.mxu0 0
    %600 = vmatprep.subr.bf16.mxu0 0
    %601 = vmatpush1.bf16.xpose.msra.mxu0 0
    %602 = vmatprep.subr.bf16.mxu0 0
    %603 = vmatpush1.bf16.xpose.msra.mxu0 0
    %604 = vmatprep.subr.bf16.mxu0 0
    %605 = vmatpush1.bf16.xpose.msra.mxu0 0
    %606 = vmatprep.subr.bf16.mxu0 0
    %607 = vmatpush1.bf16.xpose.msra.mxu0 0
    %608 = vmatprep.subr.bf16.mxu0 0
    %609 = vmatpush1.bf16.xpose.msra.mxu0 0
    %610 = vmatprep.subr.bf16.mxu0 0
    %611 = vmatpush1.bf16.xpose.msra.mxu0 0
    %612 = vmatprep.subr.bf16.mxu0 0
    %613 = vmatpush1.bf16.xpose.msra.mxu0 0
    %614 = vmatprep.subr.bf16.mxu0 0
    %615 = vmatpush1.bf16.xpose.msra.mxu0 0
    %616 = vmatprep.subr.bf16.mxu0 0
    %617 = vmatpush1.bf16.xpose.msra.mxu0 0
    %618 = vmatprep.subr.bf16.mxu0 0
    %619 = vmatpush1.bf16.xpose.msra.mxu0 0
    %620 = vmatprep.subr.bf16.mxu0 0
    %621 = vmatpush1.bf16.xpose.msra.mxu0 0
    %622 = vmatprep.subr.bf16.mxu0 0
    %623 = vmatpush1.bf16.xpose.msra.mxu0 0
    %624 = vmatprep.mubr.bf16.mxu0 0
    %625 = vmatmul.mubr.bf16.gmra.mrb[0].mxu0 %v587
    %v626 = vpop.f32.mrb[0].mxu0
    %v627 = vadd.f32 0.0, %v626
    %v628 = vpop.f32.mrb[0].mxu0
    %v629 = vpop.f32.mrb[0].mxu0
    %v630 = vpop.f32.mrb[0].mxu0
    %631 = vdwg.mxu0
    %v632 = vsel %vm322, %v577, -inf
    %633 = vmax.xlane.f32.xlu0 %v632
    %v634 = vpop.xlane.xlu0 %633
    %v635 = vsel %vm322, %v627, -inf
    %636 = vmax.xlane.f32.xlu0 %v635
    %v637 = vpop.xlane.xlu0 %636
    %v638 = vsub.f32 %v577, %v634
    %v639 = vsub.f32 %v627, %v637
    %v640 = vmul.f32 %v638, 1.442695
    %v641 = vpow.pop %v640
    %v642 = vmul.f32 %v639, 1.442695
    %v643 = vpow.pop %v642
    %v644 = vsel %vm322, %v641, 0.0
    %645 = vadd.xlane.f32.xlu0 %v644
    %v646 = vpop.xlane.xlu0 %645
    %v647 = vsel %vm322, %v643, 0.0
    %648 = vadd.xlane.f32.xlu0 %v647
    %v649 = vpop.xlane.xlu0 %648
    %v650 = vrcp.pop %v646
    %v651 = vrcp.pop %v649
    %v652 = vmul.f32 %v641, %v650
    %v653 = vmul.f32 %v643, %v651
    %v654 = vpack.c.bf16 %v652, %v652
    %v655 = vpack.c.bf16 %v653, %v653
    %656 = vrot.lane.b32.xlu0 %v320, 120
    %v657 = vpop.permute.xlu0 %656
    %v659 = vsel %vm322, %v654, 0
    %v662 = vsel %vm442, %v657, 0
    %664 = vmatprep.subr.bf16.mxu0 0
    %665 = vmatpush1.bf16.msra.mxu0 %v662
    %666 = vmatprep.subr.bf16.mxu0 0
    %667 = vmatpush1.bf16.msra.mxu0 0
    %668 = vmatprep.subr.bf16.mxu0 0
    %669 = vmatpush1.bf16.msra.mxu0 0
    %670 = vmatprep.subr.bf16.mxu0 0
    %671 = vmatpush1.bf16.msra.mxu0 0
    %672 = vmatprep.subr.bf16.mxu0 0
    %673 = vmatpush1.bf16.msra.mxu0 0
    %674 = vmatprep.subr.bf16.mxu0 0
    %675 = vmatpush1.bf16.msra.mxu0 0
    %676 = vmatprep.subr.bf16.mxu0 0
    %677 = vmatpush1.bf16.msra.mxu0 0
    %678 = vmatprep.subr.bf16.mxu0 0
    %679 = vmatpush1.bf16.msra.mxu0 0
    %680 = vmatprep.subr.bf16.mxu0 0
    %681 = vmatpush1.bf16.msra.mxu0 0
    %682 = vmatprep.subr.bf16.mxu0 0
    %683 = vmatpush1.bf16.msra.mxu0 0
    %684 = vmatprep.subr.bf16.mxu0 0
    %685 = vmatpush1.bf16.msra.mxu0 0
    %686 = vmatprep.subr.bf16.mxu0 0
    %687 = vmatpush1.bf16.msra.mxu0 0
    %688 = vmatprep.subr.bf16.mxu0 0
    %689 = vmatpush1.bf16.msra.mxu0 0
    %690 = vmatprep.subr.bf16.mxu0 0
    %691 = vmatpush1.bf16.msra.mxu0 0
    %692 = vmatprep.subr.bf16.mxu0 0
    %693 = vmatpush1.bf16.msra.mxu0 0
    %694 = vmatprep.subr.bf16.mxu0 0
    %695 = vmatpush1.bf16.msra.mxu0 0
    %696 = vmatprep.mubr.bf16.mxu0 0
    %697 = vmatmul.mubr.bf16.gmra.mrb[0].mxu0 %v659
    %v698 = vpop.f32.mrb[0].mxu0
    %v699 = vadd.f32 0.0, %v698
    %v700 = vpop.f32.mrb[0].mxu0
    %v701 = vpop.f32.mrb[0].mxu0
    %v702 = vpop.f32.mrb[0].mxu0
    %703 = vdwg.mxu0
    %704 = vrot.lane.b32.xlu0 %v321, 120
    %v705 = vpop.permute.xlu0 %704
    %v707 = vsel %vm322, %v655, 0
    %v710 = vsel %vm442, %v705, 0
    %712 = vmatprep.subr.bf16.mxu0 0
    %713 = vmatpush1.bf16.msra.mxu0 %v710
    %714 = vmatprep.subr.bf16.mxu0 0
    %715 = vmatpush1.bf16.msra.mxu0 0
    %716 = vmatprep.subr.bf16.mxu0 0
    %717 = vmatpush1.bf16.msra.mxu0 0
    %718 = vmatprep.subr.bf16.mxu0 0
    %719 = vmatpush1.bf16.msra.mxu0 0
    %720 = vmatprep.subr.bf16.mxu0 0
    %721 = vmatpush1.bf16.msra.mxu0 0
    %722 = vmatprep.subr.bf16.mxu0 0
    %723 = vmatpush1.bf16.msra.mxu0 0
    %724 = vmatprep.subr.bf16.mxu0 0
    %725 = vmatpush1.bf16.msra.mxu0 0
    %726 = vmatprep.subr.bf16.mxu0 0
    %727 = vmatpush1.bf16.msra.mxu0 0
    %728 = vmatprep.subr.bf16.mxu0 0
    %729 = vmatpush1.bf16.msra.mxu0 0
    %730 = vmatprep.subr.bf16.mxu0 0
    %731 = vmatpush1.bf16.msra.mxu0 0
    %732 = vmatprep.subr.bf16.mxu0 0
    %733 = vmatpush1.bf16.msra.mxu0 0
    %734 = vmatprep.subr.bf16.mxu0 0
    %735 = vmatpush1.bf16.msra.mxu0 0
    %736 = vmatprep.subr.bf16.mxu0 0
    %737 = vmatpush1.bf16.msra.mxu0 0
    %738 = vmatprep.subr.bf16.mxu0 0
    %739 = vmatpush1.bf16.msra.mxu0 0
    %740 = vmatprep.subr.bf16.mxu0 0
    %741 = vmatpush1.bf16.msra.mxu0 0
    %742 = vmatprep.subr.bf16.mxu0 0
    %743 = vmatpush1.bf16.msra.mxu0 0
    %744 = vmatprep.mubr.bf16.mxu0 0
    %745 = vmatmul.mubr.bf16.gmra.mrb[0].mxu0 %v707
    %v746 = vpop.f32.mrb[0].mxu0
    %v747 = vadd.f32 0.0, %v746
    %v748 = vpop.f32.mrb[0].mxu0
    %v749 = vpop.f32.mrb[0].mxu0
    %v750 = vpop.f32.mrb[0].mxu0
    %751 = vdwg.mxu0
    %752 = vrot.lane.b32.xlu0 %v308, 112
    %v753 = vpop.permute.xlu0 %752
    %754 = vrot.lane.b32.xlu0 %v314, 112
    %v755 = vpop.permute.xlu0 %754
    %v757 = vsel %vm322, %v753, 0
    %v760 = vsel %vm322, %v755, 0
    %762 = vmatprep.subr.bf16.mxu0 0
    %763 = vmatpush1.bf16.xpose.msra.mxu0 %v760
    %764 = vmatprep.subr.bf16.mxu0 0
    %765 = vmatpush1.bf16.xpose.msra.mxu0 0
    %766 = vmatprep.subr.bf16.mxu0 0
    %767 = vmatpush1.bf16.xpose.msra.mxu0 0
    %768 = vmatprep.subr.bf16.mxu0 0
    %769 = vmatpush1.bf16.xpose.msra.mxu0 0
    %770 = vmatprep.subr.bf16.mxu0 0
    %771 = vmatpush1.bf16.xpose.msra.mxu0 0
    %772 = vmatprep.subr.bf16.mxu0 0
    %773 = vmatpush1.bf16.xpose.msra.mxu0 0
    %774 = vmatprep.subr.bf16.mxu0 0
    %775 = vmatpush1.bf16.xpose.msra.mxu0 0
    %776 = vmatprep.subr.bf16.mxu0 0
    %777 = vmatpush1.bf16.xpose.msra.mxu0 0
    %778 = vmatprep.subr.bf16.mxu0 0
    %779 = vmatpush1.bf16.xpose.msra.mxu0 0
    %780 = vmatprep.subr.bf16.mxu0 0
    %781 = vmatpush1.bf16.xpose.msra.mxu0 0
    %782 = vmatprep.subr.bf16.mxu0 0
    %783 = vmatpush1.bf16.xpose.msra.mxu0 0
    %784 = vmatprep.subr.bf16.mxu0 0
    %785 = vmatpush1.bf16.xpose.msra.mxu0 0
    %786 = vmatprep.subr.bf16.mxu0 0
    %787 = vmatpush1.bf16.xpose.msra.mxu0 0
    %788 = vmatprep.subr.bf16.mxu0 0
    %789 = vmatpush1.bf16.xpose.msra.mxu0 0
    %790 = vmatprep.subr.bf16.mxu0 0
    %791 = vmatpush1.bf16.xpose.msra.mxu0 0
    %792 = vmatprep.subr.bf16.mxu0 0
    %793 = vmatpush1.bf16.xpose.msra.mxu0 0
    %794 = vmatprep.mubr.bf16.mxu0 0
    %795 = vmatmul.mubr.bf16.gmra.mrb[0].mxu0 %v757
    %v796 = vpop.f32.mrb[0].mxu0
    %v797 = vadd.f32 0.0, %v796
    %v798 = vpop.f32.mrb[0].mxu0
    %v799 = vpop.f32.mrb[0].mxu0
    %v800 = vpop.f32.mrb[0].mxu0
    %801 = vdwg.mxu0
    %802 = vrot.lane.b32.xlu0 %v309, 112
    %v803 = vpop.permute.xlu0 %802
    %804 = vrot.lane.b32.xlu0 %v315, 112
    %v805 = vpop.permute.xlu0 %804
    %v807 = vsel %vm322, %v803, 0
    %v810 = vsel %vm322, %v805, 0
    %812 = vmatprep.subr.bf16.mxu0 0
    %813 = vmatpush1.bf16.xpose.msra.mxu0 %v810
    %814 = vmatprep.subr.bf16.mxu0 0
    %815 = vmatpush1.bf16.xpose.msra.mxu0 0
    %816 = vmatprep.subr.bf16.mxu0 0
    %817 = vmatpush1.bf16.xpose.msra.mxu0 0
    %818 = vmatprep.subr.bf16.mxu0 0
    %819 = vmatpush1.bf16.xpose.msra.mxu0 0
    %820 = vmatprep.subr.bf16.mxu0 0
    %821 = vmatpush1.bf16.xpose.msra.mxu0 0
    %822 = vmatprep.subr.bf16.mxu0 0
    %823 = vmatpush1.bf16.xpose.msra.mxu0 0
    %824 = vmatprep.subr.bf16.mxu0 0
    %825 = vmatpush1.bf16.xpose.msra.mxu0 0
    %826 = vmatprep.subr.bf16.mxu0 0
    %827 = vmatpush1.bf16.xpose.msra.mxu0 0
    %828 = vmatprep.subr.bf16.mxu0 0
    %829 = vmatpush1.bf16.xpose.msra.mxu0 0
    %830 = vmatprep.subr.bf16.mxu0 0
    %831 = vmatpush1.bf16.xpose.msra.mxu0 0
    %832 = vmatprep.subr.bf16.mxu0 0
    %833 = vmatpush1.bf16.xpose.msra.mxu0 0
    %834 = vmatprep.subr.bf16.mxu0 0
    %835 = vmatpush1.bf16.xpose.msra.mxu0 0
    %836 = vmatprep.subr.bf16.mxu0 0
    %837 = vmatpush1.bf16.xpose.msra.mxu0 0
    %838 = vmatprep.subr.bf16.mxu0 0
    %839 = vmatpush1.bf16.xpose.msra.mxu0 0
    %840 = vmatprep.subr.bf16.mxu0 0
    %841 = vmatpush1.bf16.xpose.msra.mxu0 0
    %842 = vmatprep.subr.bf16.mxu0 0
    %843 = vmatpush1.bf16.xpose.msra.mxu0 0
    %844 = vmatprep.mubr.bf16.mxu0 0
    %845 = vmatmul.mubr.bf16.gmra.mrb[0].mxu0 %v807
    %v846 = vpop.f32.mrb[0].mxu0
    %v847 = vadd.f32 0.0, %v846
    %v848 = vpop.f32.mrb[0].mxu0
    %v849 = vpop.f32.mrb[0].mxu0
    %v850 = vpop.f32.mrb[0].mxu0
    %851 = vdwg.mxu0
    %v852 = vsel %vm322, %v797, -inf
    %853 = vmax.xlane.f32.xlu0 %v852
    %v854 = vpop.xlane.xlu0 %853
    %v855 = vsel %vm322, %v847, -inf
    %856 = vmax.xlane.f32.xlu0 %v855
    %v857 = vpop.xlane.xlu0 %856
    %v858 = vsub.f32 %v797, %v854
    %v859 = vsub.f32 %v847, %v857
    %v860 = vmul.f32 %v858, 1.442695
    %v861 = vpow.pop %v860
    %v862 = vmul.f32 %v859, 1.442695
    %v863 = vpow.pop %v862
    %v864 = vsel %vm322, %v861, 0.0
    %865 = vadd.xlane.f32.xlu0 %v864
    %v866 = vpop.xlane.xlu0 %865
    %v867 = vsel %vm322, %v863, 0.0
    %868 = vadd.xlane.f32.xlu0 %v867
    %v869 = vpop.xlane.xlu0 %868
    %v870 = vrcp.pop %v866
    %v871 = vrcp.pop %v869
    %v872 = vmul.f32 %v861, %v870
    %v873 = vmul.f32 %v863, %v871
    %v874 = vpack.c.bf16 %v872, %v872
    %v875 = vpack.c.bf16 %v873, %v873
    %876 = vrot.lane.b32.xlu0 %v320, 112
    %v877 = vpop.permute.xlu0 %876
    %v879 = vsel %vm322, %v874, 0
    %v882 = vsel %vm442, %v877, 0
    %884 = vmatprep.subr.bf16.mxu0 0
    %885 = vmatpush1.bf16.msra.mxu0 %v882
    %886 = vmatprep.subr.bf16.mxu0 0
    %887 = vmatpush1.bf16.msra.mxu0 0
    %888 = vmatprep.subr.bf16.mxu0 0
    %889 = vmatpush1.bf16.msra.mxu0 0
    %890 = vmatprep.subr.bf16.mxu0 0
    %891 = vmatpush1.bf16.msra.mxu0 0
    %892 = vmatprep.subr.bf16.mxu0 0
    %893 = vmatpush1.bf16.msra.mxu0 0
    %894 = vmatprep.subr.bf16.mxu0 0
    %895 = vmatpush1.bf16.msra.mxu0 0
    %896 = vmatprep.subr.bf16.mxu0 0
    %897 = vmatpush1.bf16.msra.mxu0 0
    %898 = vmatprep.subr.bf16.mxu0 0
    %899 = vmatpush1.bf16.msra.mxu0 0
    %900 = vmatprep.subr.bf16.mxu0 0
    %901 = vmatpush1.bf16.msra.mxu0 0
    %902 = vmatprep.subr.bf16.mxu0 0
    %903 = vmatpush1.bf16.msra.mxu0 0
    %904 = vmatprep.subr.bf16.mxu0 0
    %905 = vmatpush1.bf16.msra.mxu0 0
    %906 = vmatprep.subr.bf16.mxu0 0
    %907 = vmatpush1.bf16.msra.mxu0 0
    %908 = vmatprep.subr.bf16.mxu0 0
    %909 = vmatpush1.bf16.msra.mxu0 0
    %910 = vmatprep.subr.bf16.mxu0 0
    %911 = vmatpush1.bf16.msra.mxu0 0
    %912 = vmatprep.subr.bf16.mxu0 0
    %913 = vmatpush1.bf16.msra.mxu0 0
    %914 = vmatprep.subr.bf16.mxu0 0
    %915 = vmatpush1.bf16.msra.mxu0 0
    %916 = vmatprep.mubr.bf16.mxu0 0
    %917 = vmatmul.mubr.bf16.gmra.mrb[0].mxu0 %v879
    %v918 = vpop.f32.mrb[0].mxu0
    %v919 = vadd.f32 0.0, %v918
    %v920 = vpop.f32.mrb[0].mxu0
    %v921 = vpop.f32.mrb[0].mxu0
    %v922 = vpop.f32.mrb[0].mxu0
    %923 = vdwg.mxu0
    %924 = vrot.lane.b32.xlu0 %v321, 112
    %v925 = vpop.permute.xlu0 %924
    %v927 = vsel %vm322, %v875, 0
    %v930 = vsel %vm442, %v925, 0
    %932 = vmatprep.subr.bf16.mxu0 0
    %933 = vmatpush1.bf16.msra.mxu0 %v930
    %934 = vmatprep.subr.bf16.mxu0 0
    %935 = vmatpush1.bf16.msra.mxu0 0
    %936 = vmatprep.subr.bf16.mxu0 0
    %937 = vmatpush1.bf16.msra.mxu0 0
    %938 = vmatprep.subr.bf16.mxu0 0
    %939 = vmatpush1.bf16.msra.mxu0 0
    %940 = vmatprep.subr.bf16.mxu0 0
    %941 = vmatpush1.bf16.msra.mxu0 0
    %942 = vmatprep.subr.bf16.mxu0 0
    %943 = vmatpush1.bf16.msra.mxu0 0
    %944 = vmatprep.subr.bf16.mxu0 0
    %945 = vmatpush1.bf16.msra.mxu0 0
    %946 = vmatprep.subr.bf16.mxu0 0
    %947 = vmatpush1.bf16.msra.mxu0 0
    %948 = vmatprep.subr.bf16.mxu0 0
    %949 = vmatpush1.bf16.msra.mxu0 0
    %950 = vmatprep.subr.bf16.mxu0 0
    %951 = vmatpush1.bf16.msra.mxu0 0
    %952 = vmatprep.subr.bf16.mxu0 0
    %953 = vmatpush1.bf16.msra.mxu0 0
    %954 = vmatprep.subr.bf16.mxu0 0
    %955 = vmatpush1.bf16.msra.mxu0 0
    %956 = vmatprep.subr.bf16.mxu0 0
    %957 = vmatpush1.bf16.msra.mxu0 0
    %958 = vmatprep.subr.bf16.mxu0 0
    %959 = vmatpush1.bf16.msra.mxu0 0
    %960 = vmatprep.subr.bf16.mxu0 0
    %961 = vmatpush1.bf16.msra.mxu0 0
    %962 = vmatprep.subr.bf16.mxu0 0
    %963 = vmatpush1.bf16.msra.mxu0 0
    %964 = vmatprep.mubr.bf16.mxu0 0
    %965 = vmatmul.mubr.bf16.gmra.mrb[0].mxu0 %v927
    %v966 = vpop.f32.mrb[0].mxu0
    %v967 = vadd.f32 0.0, %v966
    %v968 = vpop.f32.mrb[0].mxu0
    %v969 = vpop.f32.mrb[0].mxu0
    %v970 = vpop.f32.mrb[0].mxu0
    %971 = vdwg.mxu0
    %972 = vrot.lane.b32.xlu0 %v308, 104
    %v973 = vpop.permute.xlu0 %972
    %974 = vrot.lane.b32.xlu0 %v314, 104
    %v975 = vpop.permute.xlu0 %974
    %v977 = vsel %vm322, %v973, 0
    %v980 = vsel %vm322, %v975, 0
    %982 = vmatprep.subr.bf16.mxu0 0
    %983 = vmatpush1.bf16.xpose.msra.mxu0 %v980
    %984 = vmatprep.subr.bf16.mxu0 0
    %985 = vmatpush1.bf16.xpose.msra.mxu0 0
    %986 = vmatprep.subr.bf16.mxu0 0
    %987 = vmatpush1.bf16.xpose.msra.mxu0 0
    %988 = vmatprep.subr.bf16.mxu0 0
    %989 = vmatpush1.bf16.xpose.msra.mxu0 0
    %990 = vmatprep.subr.bf16.mxu0 0
    %991 = vmatpush1.bf16.xpose.msra.mxu0 0
    %992 = vmatprep.subr.bf16.mxu0 0
    %993 = vmatpush1.bf16.xpose.msra.mxu0 0
    %994 = vmatprep.subr.bf16.mxu0 0
    %995 = vmatpush1.bf16.xpose.msra.mxu0 0
    %996 = vmatprep.subr.bf16.mxu0 0
    %997 = vmatpush1.bf16.xpose.msra.mxu0 0
    %998 = vmatprep.subr.bf16.mxu0 0
    %999 = vmatpush1.bf16.xpose.msra.mxu0 0
    %1000 = vmatprep.subr.bf16.mxu0 0
    %1001 = vmatpush1.bf16.xpose.msra.mxu0 0
    %1002 = vmatprep.subr.bf16.mxu0 0
    %1003 = vmatpush1.bf16.xpose.msra.mxu0 0
    %1004 = vmatprep.subr.bf16.mxu0 0
    %1005 = vmatpush1.bf16.xpose.msra.mxu0 0
    %1006 = vmatprep.subr.bf16.mxu0 0
    %1007 = vmatpush1.bf16.xpose.msra.mxu0 0
    %1008 = vmatprep.subr.bf16.mxu0 0
    %1009 = vmatpush1.bf16.xpose.msra.mxu0 0
    %1010 = vmatprep.subr.bf16.mxu0 0
    %1011 = vmatpush1.bf16.xpose.msra.mxu0 0
    %1012 = vmatprep.subr.bf16.mxu0 0
    %1013 = vmatpush1.bf16.xpose.msra.mxu0 0
    %1014 = vmatprep.mubr.bf16.mxu0 0
    %1015 = vmatmul.mubr.bf16.gmra.mrb[0].mxu0 %v977
    %v1016 = vpop.f32.mrb[0].mxu0
    %v1017 = vadd.f32 0.0, %v1016
    %v1018 = vpop.f32.mrb[0].mxu0
    %v1019 = vpop.f32.mrb[0].mxu0
    %v1020 = vpop.f32.mrb[0].mxu0
    %1021 = vdwg.mxu0
    %1022 = vrot.lane.b32.xlu0 %v309, 104
    %v1023 = vpop.permute.xlu0 %1022
    %1024 = vrot.lane.b32.xlu0 %v315, 104
    %v1025 = vpop.permute.xlu0 %1024
    %v1027 = vsel %vm322, %v1023, 0
    %v1030 = vsel %vm322, %v1025, 0
    %1032 = vmatprep.subr.bf16.mxu0 0
    %1033 = vmatpush1.bf16.xpose.msra.mxu0 %v1030
    %1034 = vmatprep.subr.bf16.mxu0 0
    %1035 = vmatpush1.bf16.xpose.msra.mxu0 0
    %1036 = vmatprep.subr.bf16.mxu0 0
    %1037 = vmatpush1.bf16.xpose.msra.mxu0 0
    %1038 = vmatprep.subr.bf16.mxu0 0
    %1039 = vmatpush1.bf16.xpose.msra.mxu0 0
    %1040 = vmatprep.subr.bf16.mxu0 0
    %1041 = vmatpush1.bf16.xpose.msra.mxu0 0
    %1042 = vmatprep.subr.bf16.mxu0 0
    %1043 = vmatpush1.bf16.xpose.msra.mxu0 0
    %1044 = vmatprep.subr.bf16.mxu0 0
    %1045 = vmatpush1.bf16.xpose.msra.mxu0 0
    %1046 = vmatprep.subr.bf16.mxu0 0
    %1047 = vmatpush1.bf16.xpose.msra.mxu0 0
    %1048 = vmatprep.subr.bf16.mxu0 0
    %1049 = vmatpush1.bf16.xpose.msra.mxu0 0
    %1050 = vmatprep.subr.bf16.mxu0 0
    %1051 = vmatpush1.bf16.xpose.msra.mxu0 0
    %1052 = vmatprep.subr.bf16.mxu0 0
    %1053 = vmatpush1.bf16.xpose.msra.mxu0 0
    %1054 = vmatprep.subr.bf16.mxu0 0
    %1055 = vmatpush1.bf16.xpose.msra.mxu0 0
    %1056 = vmatprep.subr.bf16.mxu0 0
    %1057 = vmatpush1.bf16.xpose.msra.mxu0 0
    %1058 = vmatprep.subr.bf16.mxu0 0
    %1059 = vmatpush1.bf16.xpose.msra.mxu0 0
    %1060 = vmatprep.subr.bf16.mxu0 0
    %1061 = vmatpush1.bf16.xpose.msra.mxu0 0
    %1062 = vmatprep.subr.bf16.mxu0 0
    %1063 = vmatpush1.bf16.xpose.msra.mxu0 0
    %1064 = vmatprep.mubr.bf16.mxu0 0
    %1065 = vmatmul.mubr.bf16.gmra.mrb[0].mxu0 %v1027
    %v1066 = vpop.f32.mrb[0].mxu0
    %v1067 = vadd.f32 0.0, %v1066
    %v1068 = vpop.f32.mrb[0].mxu0
    %v1069 = vpop.f32.mrb[0].mxu0
    %v1070 = vpop.f32.mrb[0].mxu0
    %1071 = vdwg.mxu0
    %v1072 = vsel %vm322, %v1017, -inf
    %1073 = vmax.xlane.f32.xlu0 %v1072
    %v1074 = vpop.xlane.xlu0 %1073
    %v1075 = vsel %vm322, %v1067, -inf
    %1076 = vmax.xlane.f32.xlu0 %v1075
    %v1077 = vpop.xlane.xlu0 %1076
    %v1078 = vsub.f32 %v1017, %v1074
    %v1079 = vsub.f32 %v1067, %v1077
    %v1080 = vmul.f32 %v1078, 1.442695
    %v1081 = vpow.pop %v1080
    %v1082 = vmul.f32 %v1079, 1.442695
    %v1083 = vpow.pop %v1082
    %v1084 = vsel %vm322, %v1081, 0.0
    %1085 = vadd.xlane.f32.xlu0 %v1084
    %v1086 = vpop.xlane.xlu0 %1085
    %v1087 = vsel %vm322, %v1083, 0.0
    %1088 = vadd.xlane.f32.xlu0 %v1087
    %v1089 = vpop.xlane.xlu0 %1088
    %v1090 = vrcp.pop %v1086
    %v1091 = vrcp.pop %v1089
    %v1092 = vmul.f32 %v1081, %v1090
    %v1093 = vmul.f32 %v1083, %v1091
    %v1094 = vpack.c.bf16 %v1092, %v1092
    %v1095 = vpack.c.bf16 %v1093, %v1093
    %1096 = vrot.lane.b32.xlu0 %v320, 104
    %v1097 = vpop.permute.xlu0 %1096
    %v1099 = vsel %vm322, %v1094, 0
    %v1102 = vsel %vm442, %v1097, 0
    %1104 = vmatprep.subr.bf16.mxu0 0
    %1105 = vmatpush1.bf16.msra.mxu0 %v1102
    %1106 = vmatprep.subr.bf16.mxu0 0
    %1107 = vmatpush1.bf16.msra.mxu0 0
    %1108 = vmatprep.subr.bf16.mxu0 0
    %1109 = vmatpush1.bf16.msra.mxu0 0
    %1110 = vmatprep.subr.bf16.mxu0 0
    %1111 = vmatpush1.bf16.msra.mxu0 0
    %1112 = vmatprep.subr.bf16.mxu0 0
    %1113 = vmatpush1.bf16.msra.mxu0 0
    %1114 = vmatprep.subr.bf16.mxu0 0
    %1115 = vmatpush1.bf16.msra.mxu0 0
    %1116 = vmatprep.subr.bf16.mxu0 0
    %1117 = vmatpush1.bf16.msra.mxu0 0
    %1118 = vmatprep.subr.bf16.mxu0 0
    %1119 = vmatpush1.bf16.msra.mxu0 0
    %1120 = vmatprep.subr.bf16.mxu0 0
    %1121 = vmatpush1.bf16.msra.mxu0 0
    %1122 = vmatprep.subr.bf16.mxu0 0
    %1123 = vmatpush1.bf16.msra.mxu0 0
    %1124 = vmatprep.subr.bf16.mxu0 0
    %1125 = vmatpush1.bf16.msra.mxu0 0
    %1126 = vmatprep.subr.bf16.mxu0 0
    %1127 = vmatpush1.bf16.msra.mxu0 0
    %1128 = vmatprep.subr.bf16.mxu0 0
    %1129 = vmatpush1.bf16.msra.mxu0 0
    %1130 = vmatprep.subr.bf16.mxu0 0
    %1131 = vmatpush1.bf16.msra.mxu0 0
    %1132 = vmatprep.subr.bf16.mxu0 0
    %1133 = vmatpush1.bf16.msra.mxu0 0
    %1134 = vmatprep.subr.bf16.mxu0 0
    %1135 = vmatpush1.bf16.msra.mxu0 0
    %1136 = vmatprep.mubr.bf16.mxu0 0
    %1137 = vmatmul.mubr.bf16.gmra.mrb[0].mxu0 %v1099
    %v1138 = vpop.f32.mrb[0].mxu0
    %v1139 = vadd.f32 0.0, %v1138
    %v1140 = vpop.f32.mrb[0].mxu0
    %v1141 = vpop.f32.mrb[0].mxu0
    %v1142 = vpop.f32.mrb[0].mxu0
    %1143 = vdwg.mxu0
    %1144 = vrot.lane.b32.xlu0 %v321, 104
    %v1145 = vpop.permute.xlu0 %1144
    %v1147 = vsel %vm322, %v1095, 0
    %v1150 = vsel %vm442, %v1145, 0
    %1152 = vmatprep.subr.bf16.mxu0 0
    %1153 = vmatpush1.bf16.msra.mxu0 %v1150
    %1154 = vmatprep.subr.bf16.mxu0 0
    %1155 = vmatpush1.bf16.msra.mxu0 0
    %1156 = vmatprep.subr.bf16.mxu0 0
    %1157 = vmatpush1.bf16.msra.mxu0 0
    %1158 = vmatprep.subr.bf16.mxu0 0
    %1159 = vmatpush1.bf16.msra.mxu0 0
    %1160 = vmatprep.subr.bf16.mxu0 0
    %1161 = vmatpush1.bf16.msra.mxu0 0
    %1162 = vmatprep.subr.bf16.mxu0 0
    %1163 = vmatpush1.bf16.msra.mxu0 0
    %1164 = vmatprep.subr.bf16.mxu0 0
    %1165 = vmatpush1.bf16.msra.mxu0 0
    %1166 = vmatprep.subr.bf16.mxu0 0
    %1167 = vmatpush1.bf16.msra.mxu0 0
    %1168 = vmatprep.subr.bf16.mxu0 0
    %1169 = vmatpush1.bf16.msra.mxu0 0
    %1170 = vmatprep.subr.bf16.mxu0 0
    %1171 = vmatpush1.bf16.msra.mxu0 0
    %1172 = vmatprep.subr.bf16.mxu0 0
    %1173 = vmatpush1.bf16.msra.mxu0 0
    %1174 = vmatprep.subr.bf16.mxu0 0
    %1175 = vmatpush1.bf16.msra.mxu0 0
    %1176 = vmatprep.subr.bf16.mxu0 0
    %1177 = vmatpush1.bf16.msra.mxu0 0
    %1178 = vmatprep.subr.bf16.mxu0 0
    %1179 = vmatpush1.bf16.msra.mxu0 0
    %1180 = vmatprep.subr.bf16.mxu0 0
    %1181 = vmatpush1.bf16.msra.mxu0 0
    %1182 = vmatprep.subr.bf16.mxu0 0
    %1183 = vmatpush1.bf16.msra.mxu0 0
    %1184 = vmatprep.mubr.bf16.mxu0 0
    %1185 = vmatmul.mubr.bf16.gmra.mrb[0].mxu0 %v1147
    %v1186 = vpop.f32.mrb[0].mxu0
    %v1187 = vadd.f32 0.0, %v1186
    %v1188 = vpop.f32.mrb[0].mxu0
    %v1189 = vpop.f32.mrb[0].mxu0
    %v1190 = vpop.f32.mrb[0].mxu0
    %1191 = vdwg.mxu0
    %1194 = vrot.lane.b32.xlu0 %v699, 8
    %v1195 = vpop.permute.xlu0 %1194
    %1196 = vrot.lane.b32.xlu0 %v747, 8
    %v1197 = vpop.permute.xlu0 %1196
    %1202 = vrot.lane.b32.xlu0 %v919, 16
    %v1203 = vpop.permute.xlu0 %1202
    %1204 = vrot.lane.b32.xlu0 %v967, 16
    %v1205 = vpop.permute.xlu0 %1204
    %1210 = vrot.lane.b32.xlu0 %v1139, 24
    %v1211 = vpop.permute.xlu0 %1210
    %1212 = vrot.lane.b32.xlu0 %v1187, 24
    %v1213 = vpop.permute.xlu0 %1212
    %v1216 = vsel %vm322, %v481, %v1195
    %v1217 = vsel %vm322, %v527, %v1197
    %vm1218 = vcmask 130048
    %v1219 = vsel %vm1218, %v1216, %v1203
    %v1220 = vsel %vm1218, %v1217, %v1205
    %vm1221 = vcmask 195584
    %v1222 = vsel %vm1221, %v1219, %v1211
    %v1223 = vsel %vm1221, %v1220, %v1213
    %v1224 = vpack.c.bf16 %v1223, %v1222
    %v1225 = vld [vmem:[%s5] sm:$0xf]
    %v1226 = vld [vmem:[%s5 + $0x4] sm:$0xf]
    %v1227 = vld [vmem:[%s5 + $0x8] sm:$0xf]
    %v1228 = vld [vmem:[%s5 + $0xc] sm:$0xf]
    %v1229 = vld [vmem:[%s6] sm:$0x1]
    %v1231 = vlaneseq
    %v1232 = vshrl.u32 %v1231, 7
    %v1233 = vsub.s32 0, %v1232
    %v1234 = vrot.slane %v1229, %v1233
    %v1240 = vunpack.c.l.b16 %v1225
    %v1241 = vunpack.c.l.b16 %v1226
    %v1242 = vunpack.c.l.b16 %v1227
    %v1243 = vunpack.c.l.b16 %v1228
    %v1244 = vpack.c.b16 %v1241, %v1240
    %v1245 = vpack.c.b16 %v1243, %v1242
    %v1249 = vsel %vm58, %v1224, 0
    %1251 = vmatprep.subr.bf16.mxu0 0
    %1252 = vmatpush1.bf16.msra.mxu0 %v1244
    %1253 = vmatprep.subr.bf16.mxu0 0
    %1254 = vmatpush1.bf16.msra.mxu0 %v1245
    %1255 = vmatprep.subr.bf16.mxu0 0
    %1256 = vmatpush1.bf16.msra.mxu0 0
    %1257 = vmatprep.subr.bf16.mxu0 0
    %1258 = vmatpush1.bf16.msra.mxu0 0
    %1259 = vmatprep.subr.bf16.mxu0 0
    %1260 = vmatpush1.bf16.msra.mxu0 0
    %1261 = vmatprep.subr.bf16.mxu0 0
    %1262 = vmatpush1.bf16.msra.mxu0 0
    %1263 = vmatprep.subr.bf16.mxu0 0
    %1264 = vmatpush1.bf16.msra.mxu0 0
    %1265 = vmatprep.subr.bf16.mxu0 0
    %1266 = vmatpush1.bf16.msra.mxu0 0
    %1267 = vmatprep.subr.bf16.mxu0 0
    %1268 = vmatpush1.bf16.msra.mxu0 0
    %1269 = vmatprep.subr.bf16.mxu0 0
    %1270 = vmatpush1.bf16.msra.mxu0 0
    %1271 = vmatprep.subr.bf16.mxu0 0
    %1272 = vmatpush1.bf16.msra.mxu0 0
    %1273 = vmatprep.subr.bf16.mxu0 0
    %1274 = vmatpush1.bf16.msra.mxu0 0
    %1275 = vmatprep.subr.bf16.mxu0 0
    %1276 = vmatpush1.bf16.msra.mxu0 0
    %1277 = vmatprep.subr.bf16.mxu0 0
    %1278 = vmatpush1.bf16.msra.mxu0 0
    %1279 = vmatprep.subr.bf16.mxu0 0
    %1280 = vmatpush1.bf16.msra.mxu0 0
    %1281 = vmatprep.subr.bf16.mxu0 0
    %1282 = vmatpush1.bf16.msra.mxu0 0
    %1283 = vmatprep.mubr.bf16.mxu0 0
    %1284 = vmatmul.mubr.bf16.gmra.mrb[0].mxu0 %v1249
    %v1285 = vpop.f32.mrb[0].mxu0
    %v1286 = vadd.f32 %v1234, %v1285
    %v1287 = vpop.f32.mrb[0].mxu0
    %v1288 = vpop.f32.mrb[0].mxu0
    %v1289 = vadd.f32 %v1234, %v1288
    %v1290 = vpop.f32.mrb[0].mxu0
    %1291 = vdwg.mxu0
    %v1292 = vadd.f32 %v54, %v1286
    %v1293 = vadd.f32 %v55, %v1289
    %v1294 = vsel %vm58, %v1292, 0.0
    %1295 = vadd.xlane.f32.xlu0 %v1294
    %v1296 = vpop.xlane.xlu0 %1295
    %v1297 = vsel %vm58, %v1293, 0.0
    %1298 = vadd.xlane.f32.xlu0 %v1297
    %v1299 = vpop.xlane.xlu0 %1298
    %v1300 = vmul.f32 %v1296, %v65
    %v1301 = vmul.f32 %v1299, %v65
    %v1302 = vsub.f32 %v1292, %v1300
    %v1303 = vsub.f32 %v1293, %v1301
    %v1304 = vmul.f32 %v1302, %v1302
    %v1305 = vmul.f32 %v1303, %v1303
    %v1306 = vsel %vm58, %v1304, 0.0
    %1307 = vadd.xlane.f32.xlu0 %v1306
    %v1308 = vpop.xlane.xlu0 %1307
    %v1309 = vsel %vm58, %v1305, 0.0
    %1310 = vadd.xlane.f32.xlu0 %v1309
    %v1311 = vpop.xlane.xlu0 %1310
    %v1312 = vmul.f32 %v1308, %v65
    %v1313 = vmul.f32 %v1311, %v65
    %v1314 = vadd.f32 %v1312, 1e-05
    %v1315 = vadd.f32 %v1313, 1e-05
    %v1316 = vrsqrt.pop %v1314
    %v1317 = vrsqrt.pop %v1315
    %v1318 = vmul.f32 %v1302, %v1316
    %v1319 = vmul.f32 %v1303, %v1317
    %v1320 = vmul.f32 %v1318, %v90
    %v1321 = vmul.f32 %v1319, %v90
    %v1322 = vadd.f32 %v1320, %v98
    %v1323 = vadd.f32 %v1321, %v98
    %v1324 = vpack.c.bf16 %v1323, %v1322
    %v1325 = vld [vmem:[#allocation2] sm:$0xf]
    %v1326 = vld [vmem:[#allocation2 + $0x4] sm:$0xf]
    %v1327 = vld [vmem:[#allocation2 + $0x8] sm:$0xf]
    %v1328 = vld [vmem:[#allocation2 + $0xc] sm:$0xf]
    %v1329 = vld [vmem:[%s8] sm:$0x1]
    %v1331 = vlaneseq
    %v1332 = vshrl.u32 %v1331, 7
    %v1333 = vsub.s32 0, %v1332
    %v1334 = vrot.slane %v1329, %v1333
    %v1340 = vunpack.c.l.b16 %v1325
    %v1341 = vunpack.c.l.b16 %v1326
    %v1342 = vunpack.c.l.b16 %v1327
    %v1343 = vunpack.c.l.b16 %v1328
    %v1344 = vpack.c.b16 %v1341, %v1340
    %v1345 = vpack.c.b16 %v1343, %v1342
    %v1349 = vsel %vm58, %v1324, 0
    %1351 = vmatprep.subr.bf16.mxu0 0
    %1352 = vmatpush1.bf16.msra.mxu0 %v1344
    %1353 = vmatprep.subr.bf16.mxu0 0
    %1354 = vmatpush1.bf16.msra.mxu0 %v1345
    %1355 = vmatprep.subr.bf16.mxu0 0
    %1356 = vmatpush1.bf16.msra.mxu0 0
    %1357 = vmatprep.subr.bf16.mxu0 0
    %1358 = vmatpush1.bf16.msra.mxu0 0
    %1359 = vmatprep.subr.bf16.mxu0 0
    %1360 = vmatpush1.bf16.msra.mxu0 0
    %1361 = vmatprep.subr.bf16.mxu0 0
    %1362 = vmatpush1.bf16.msra.mxu0 0
    %1363 = vmatprep.subr.bf16.mxu0 0
    %1364 = vmatpush1.bf16.msra.mxu0 0
    %1365 = vmatprep.subr.bf16.mxu0 0
    %1366 = vmatpush1.bf16.msra.mxu0 0
    %1367 = vmatprep.subr.bf16.mxu0 0
    %1368 = vmatpush1.bf16.msra.mxu0 0
    %1369 = vmatprep.subr.bf16.mxu0 0
    %1370 = vmatpush1.bf16.msra.mxu0 0
    %1371 = vmatprep.subr.bf16.mxu0 0
    %1372 = vmatpush1.bf16.msra.mxu0 0
    %1373 = vmatprep.subr.bf16.mxu0 0
    %1374 = vmatpush1.bf16.msra.mxu0 0
    %1375 = vmatprep.subr.bf16.mxu0 0
    %1376 = vmatpush1.bf16.msra.mxu0 0
    %1377 = vmatprep.subr.bf16.mxu0 0
    %1378 = vmatpush1.bf16.msra.mxu0 0
    %1379 = vmatprep.subr.bf16.mxu0 0
    %1380 = vmatpush1.bf16.msra.mxu0 0
    %1381 = vmatprep.subr.bf16.mxu0 0
    %1382 = vmatpush1.bf16.msra.mxu0 0
    %1383 = vmatprep.mubr.bf16.mxu0 0
    %1384 = vmatmul.mubr.bf16.gmra.mrb[0].mxu0 %v1349
    %v1385 = vpop.f32.mrb[0].mxu0
    %v1386 = vadd.f32 %v1334, %v1385
    %v1387 = vpop.f32.mrb[0].mxu0
    %v1388 = vpop.f32.mrb[0].mxu0
    %v1389 = vadd.f32 %v1334, %v1388
    %v1390 = vpop.f32.mrb[0].mxu0
    %1391 = vdwg.mxu0
    %v1392 = vmul.f32 %v1386, 0.5
    %v1393 = vmul.f32 %v1389, 0.5
    %v1394 = vmul.f32 %v1386, 0.044715
    %v1395 = vmul.f32 %v1389, 0.044715
    %v1396 = vmul.f32 %v1394, %v1386
    %v1397 = vmul.f32 %v1395, %v1389
    %v1398 = vmul.f32 %v1396, %v1386
    %v1399 = vmul.f32 %v1397, %v1389
    %v1400 = vadd.f32 %v1386, %v1398
    %v1401 = vadd.f32 %v1389, %v1399
    %v1402 = vmul.f32 %v1400, 0.7978846
    %v1403 = vmul.f32 %v1401, 0.7978846
    %v1404 = vtanh.pop %v1402
    %v1405 = vtanh.pop %v1403
    %v1406 = vadd.f32 %v1404, 1.0
    %v1407 = vadd.f32 %v1405, 1.0
    %v1408 = vmul.f32 %v1392, %v1406
    %v1409 = vmul.f32 %v1393, %v1407
    %v1410 = vpack.c.bf16 %v1409, %v1408
    %v1411 = vld [vmem:[%s9] sm:$0xf]
    %v1412 = vld [vmem:[%s9 + $0x4] sm:$0xf]
    %v1413 = vld [vmem:[%s9 + $0x8] sm:$0xf]
    %v1414 = vld [vmem:[%s9 + $0xc] sm:$0xf]
    %v1415 = vld [vmem:[%s9 + $0x10] sm:$0xf]
    %v1416 = vld [vmem:[%s9 + $0x14] sm:$0xf]
    %v1417 = vld [vmem:[%s9 + $0x18] sm:$0xf]
    %v1418 = vld [vmem:[%s9 + $0x1c] sm:$0xf]
    %v1419 = vld [vmem:[%s9 + $0x20] sm:$0xf]
    %v1420 = vld [vmem:[%s9 + $0x24] sm:$0xf]
    %v1421 = vld [vmem:[%s9 + $0x28] sm:$0xf]
    %v1422 = vld [vmem:[%s9 + $0x2c] sm:$0xf]
    %v1423 = vld [vmem:[%s9 + $0x30] sm:$0xf]
    %v1424 = vld [vmem:[%s9 + $0x34] sm:$0xf]
    %v1425 = vld [vmem:[%s9 + $0x38] sm:$0xf]
    %v1426 = vld [vmem:[%s9 + $0x3c] sm:$0xf]
    %v1427 = vld [vmem:[%s10] sm:$0x1]
    %v1429 = vlaneseq
    %v1430 = vshrl.u32 %v1429, 7
    %v1431 = vsub.s32 0, %v1430
    %v1432 = vrot.slane %v1427, %v1431
    %v1450 = vunpack.c.l.b16 %v1411
    %v1451 = vunpack.c.l.b16 %v1412
    %v1452 = vunpack.c.l.b16 %v1413
    %v1453 = vunpack.c.l.b16 %v1414
    %v1454 = vunpack.c.l.b16 %v1415
    %v1455 = vunpack.c.l.b16 %v1416
    %v1456 = vunpack.c.l.b16 %v1417
    %v1457 = vunpack.c.l.b16 %v1418
    %v1458 = vunpack.c.l.b16 %v1419
    %v1459 = vunpack.c.l.b16 %v1420
    %v1460 = vunpack.c.l.b16 %v1421
    %v1461 = vunpack.c.l.b16 %v1422
    %v1462 = vunpack.c.l.b16 %v1423
    %v1463 = vunpack.c.l.b16 %v1424
    %v1464 = vunpack.c.l.b16 %v1425
    %v1465 = vunpack.c.l.b16 %v1426
    %v1466 = vpack.c.b16 %v1451, %v1450
    %v1467 = vpack.c.b16 %v1453, %v1452
    %v1468 = vpack.c.b16 %v1455, %v1454
    %v1469 = vpack.c.b16 %v1457, %v1456
    %v1470 = vpack.c.b16 %v1459, %v1458
    %v1471 = vpack.c.b16 %v1461, %v1460
    %v1472 = vpack.c.b16 %v1463, %v1462
    %v1473 = vpack.c.b16 %v1465, %v1464
    %1482 = vmatprep.subr.bf16.mxu0 0
    %1483 = vmatpush1.bf16.msra.mxu0 %v1466
    %1484 = vmatprep.subr.bf16.mxu0 0
    %1485 = vmatpush1.bf16.msra.mxu0 %v1467
    %1486 = vmatprep.subr.bf16.mxu0 0
    %1487 = vmatpush1.bf16.msra.mxu0 %v1468
    %1488 = vmatprep.subr.bf16.mxu0 0
    %1489 = vmatpush1.bf16.msra.mxu0 %v1469
    %1490 = vmatprep.subr.bf16.mxu0 0
    %1491 = vmatpush1.bf16.msra.mxu0 %v1470
    %1492 = vmatprep.subr.bf16.mxu0 0
    %1493 = vmatpush1.bf16.msra.mxu0 %v1471
    %1494 = vmatprep.subr.bf16.mxu0 0
    %1495 = vmatpush1.bf16.msra.mxu0 %v1472
    %1496 = vmatprep.subr.bf16.mxu0 0
    %1497 = vmatpush1.bf16.msra.mxu0 %v1473
    %1498 = vmatprep.subr.bf16.mxu0 0
    %1499 = vmatpush1.bf16.msra.mxu0 0
    %1500 = vmatprep.subr.bf16.mxu0 0
    %1501 = vmatpush1.bf16.msra.mxu0 0
    %1502 = vmatprep.subr.bf16.mxu0 0
    %1503 = vmatpush1.bf16.msra.mxu0 0
    %1504 = vmatprep.subr.bf16.mxu0 0
    %1505 = vmatpush1.bf16.msra.mxu0 0
    %1506 = vmatprep.subr.bf16.mxu0 0
    %1507 = vmatpush1.bf16.msra.mxu0 0
    %1508 = vmatprep.subr.bf16.mxu0 0
    %1509 = vmatpush1.bf16.msra.mxu0 0
    %1510 = vmatprep.subr.bf16.mxu0 0
    %1511 = vmatpush1.bf16.msra.mxu0 0
    %1512 = vmatprep.subr.bf16.mxu0 0
    %1513 = vmatpush1.bf16.msra.mxu0 0
    %1514 = vmatprep.mubr.bf16.mxu0 0
    %1515 = vmatmul.mubr.bf16.gmra.mrb[0].mxu0 %v1410
    %v1516 = vpop.f32.mrb[0].mxu0
    %v1517 = vadd.f32 %v1432, %v1516
    %v1518 = vpop.f32.mrb[0].mxu0
    %v1519 = vpop.f32.mrb[0].mxu0
    %v1520 = vadd.f32 %v1432, %v1519
    %v1521 = vpop.f32.mrb[0].mxu0
    %1522 = vdwg.mxu0
    %v1523 = vadd.f32 %v1292, %v1517
    %v1524 = vadd.f32 %v1293, %v1520
    %1525 = vst.msk [vmem:[#allocation5] sm:$0xff] %vm58, %v1523
    %1526 = vst.msk [vmem:[#allocation5 + $0x8] sm:$0xff] %vm58, %v1524
    // Predicated region
    $region50: #{tpu_custom_call.1} parent=1 // pred_check
      _
    $region51: #{tpu_custom_call.1} parent=1 // pred_check_branch
      %1528 = sbr.rel (0) target = $region53
    $region52: #{tpu_custom_call.1} parent=1 // pred_region
      %s1530 = ssub.s32 256, 256
      %1531 = vsyncadd [#allocation4], %s1530
      %s1532 = sshll.u32 [#allocation5], 4
      %s1533 = int_to_ptr.vmem [resolvable:$true] %s1532
      %1538 = dma.vmem_to_hbm [thread:$0]  %s1533, 256, %s11, [#allocation4], 128, 128, 8
    $region53: #{tpu_custom_call.1} parent=1 // pred_fallthru
      _
    // Predicated region
    $region54: #{tpu_custom_call.1} parent=1 // pred_check
      _
    $region55: #{tpu_custom_call.1} parent=1 // pred_check_branch
      %1540 = sbr.rel (0) target = $region57
    $region56: #{tpu_custom_call.1} parent=1 // pred_region
      %1541 = dma.done [#allocation4], 256
    $region57: #{tpu_custom_call.1} parent=1 // pred_fallthru
      _
    %1542 = vsyncpa [#allocation3], 1
    %1543 = vsyncpa [#allocation4], 1

</llo_original>
